<compile_context>
chip_gen: v7x
topology: tpu7x:2x2x1
jax: 0.10.0
libtpu: 0.0.40
codegen_flags: <defaults>
</compile_context>

<pallas_src>
import functools

import jax
import jax.numpy as jnp
import numpy as np
from jax.experimental import pallas as pl
from jax.experimental.pallas import tpu as pltpu

KH = KW = 4  # fixed 4x4 kernels in NLayerDiscriminator1


def _round_up(x, m):
    return ((x + m - 1) // m) * m


# ----------------------------- Pallas kernel -------------------------------
def _conv_mm_kernel(a_ref, w_ref, b_ref, o_ref, acc_ref, *, negative_slope, apply_act):
    """One (TM, TK) x (TK, C_pad) MXU step; accumulate over the K grid axis."""
    k = pl.program_id(1)

    @pl.when(k == 0)
    def _():
        acc_ref[...] = jnp.zeros_like(acc_ref)

    acc_ref[...] += jnp.dot(
        a_ref[...], w_ref[...], preferred_element_type=jnp.float32
    )

    @pl.when(k == pl.num_programs(1) - 1)
    def _():
        acc = acc_ref[...] + b_ref[...]
        if apply_act:
            acc = jnp.where(acc >= 0.0, acc, negative_slope * acc)  # LeakyReLU(0.2)
        o_ref[...] = acc.astype(o_ref.dtype)


def pallas_matmul_bias_act(a_bf16, w_bf16, b_f32, *, negative_slope=0.2, apply_act=True):
    """a: [M, K_pad] bf16, w: [K_pad, C_pad] bf16, b: [1, C_pad] f32 -> [M, C_pad] f32."""
    M, K_pad = a_bf16.shape
    Kw, C_pad = w_bf16.shape
    assert Kw == K_pad and K_pad % 128 == 0 and C_pad % 128 == 0

    # M tile: big enough to amortize per-step overhead, but keep >=2 grid steps
    # when M is large (v7x megacore has 2 TensorCores).
    if M >= 2048:
        tm = 1024
    elif M >= 512:
        tm = 256
    else:
        tm = _round_up(max(M, 8), 8)
    m_pad = _round_up(M, tm)
    if m_pad != M:
        a_bf16 = jnp.pad(a_bf16, ((0, m_pad - M), (0, 0)))

    # K tile: multiple of 128 that divides K_pad exactly.
    if K_pad % 512 == 0:
        tk = min(K_pad, 512)
    elif K_pad % 256 == 0:
        tk = 256
    else:
        tk = 128

    # Rough per-call VMEM budget: double-buffered a/w/out + bias + f32 accumulator.
    vmem_need = (2 * tm * tk * 2          # a tiles (bf16)
                 + 2 * tk * C_pad * 2     # w tiles (bf16)
                 + 2 * C_pad * 4          # bias
                 + 2 * tm * C_pad * 4     # out tiles (f32)
                 + tm * C_pad * 4)        # accumulator scratch
    vmem_limit = int(min(max(2 * vmem_need, 8 * 1024 * 1024), 64 * 1024 * 1024))

    kern = functools.partial(
        _conv_mm_kernel, negative_slope=negative_slope, apply_act=apply_act
    )
    out = pl.pallas_call(
        kern,
        out_shape=jax.ShapeDtypeStruct((m_pad, C_pad), jnp.float32),
        grid_spec=pltpu.PrefetchScalarGridSpec(
            num_scalar_prefetch=0,
            grid=(m_pad // tm, K_pad // tk),
            in_specs=[
                pl.BlockSpec((tm, tk), lambda i, k: (i, k)),
                pl.BlockSpec((tk, C_pad), lambda i, k: (k, 0)),
                pl.BlockSpec((1, C_pad), lambda i, k: (0, 0)),
            ],
            out_specs=pl.BlockSpec((tm, C_pad), lambda i, k: (i, 0)),
            scratch_shapes=[pltpu.VMEM((tm, C_pad), jnp.float32)],
        ),
        compiler_params=pltpu.CompilerParams(
            dimension_semantics=("parallel", "arbitrary"),
            vmem_limit_bytes=vmem_limit,
        ),
    )(a_bf16, w_bf16, b_f32)
    return out[:M]


# ------------------------------ glue (JAX) ---------------------------------
def conv2d_layer(x_nhwc, layer, *, pad=1):
    """Conv2d(k=4, stride, padding=1) via im2col + fused Pallas matmul."""
    # TODO(synk): fuse the im2col gather into the kernel (BlockSpec windows over the
    # padded NHWC input + in-kernel tap loop) to avoid the 4-16x activation blowup.
    stride = layer["stride"]
    cout = layer["cout"]
    x_p = jnp.pad(x_nhwc, ((0, 0), (pad, pad), (pad, pad), (0, 0)))
    N, Hp, Wp, C = x_p.shape
    OH = (Hp - KH) // stride + 1
    OW = (Wp - KW) // stride + 1
    assert OH >= 1 and OW >= 1, "input spatial size too small for this layer"
    patches = []
    for i in range(KH):
        for j in range(KW):
            patches.append(
                x_p[:, i : i + stride * OH : stride, j : j + stride * OW : stride, :]
            )
    # last-dim ordering (kh, kw, cin) matches the row ordering of layer["w_mat"]
    cols = jnp.concatenate(patches, axis=-1).reshape(N * OH * OW, KH * KW * C)
    K_pad = layer["w_mat"].shape[0]
    if K_pad != cols.shape[1]:
        cols = jnp.pad(cols, ((0, 0), (0, K_pad - cols.shape[1])))
    cols = cols.astype(jnp.bfloat16)
    out = pallas_matmul_bias_act(
        cols, layer["w_mat"], layer["b_mat"], apply_act=layer["act"]
    )
    return out[:, :cout].reshape(N, OH, OW, cout)


def build_params(key, input_nc=3, ndf=64, n_layers=3, use_bias=False):
    """Mirrors NLayerDiscriminator1.__init__ (norm_layer=BatchNorm2d -> use_bias=False)."""
    layers = []  # (cin, cout, stride, has_bias, apply_act)
    layers.append((input_nc, ndf, 2, True, True))
    nf_mult = 1
    for n in range(1, n_layers):
        nf_mult_prev = nf_mult
        nf_mult = min(2 ** n, 8)
        layers.append((ndf * nf_mult_prev, ndf * nf_mult, 2, use_bias, True))
    nf_mult_prev = nf_mult
    nf_mult = min(2 ** n_layers, 8)
    layers.append((ndf * nf_mult_prev, ndf * nf_mult, 1, use_bias, True))
    layers.append((ndf * nf_mult, 1, 1, True, False))

    params = []
    for (cin, cout, stride, has_b, act) in layers:
        key, k1, k2 = jax.random.split(key, 3)
        fan_in = cin * KH * KW
        w = jax.random.normal(k1, (cout, cin, KH, KW), jnp.float32) / np.sqrt(fan_in)
        if has_b:
            b = jax.random.normal(k2, (cout,), jnp.float32) * 0.01
        else:
            b = jnp.zeros((cout,), jnp.float32)
        params.append(dict(w=w, b=b, stride=stride, act=act))
    return params


def prepare_params(params):
    """Hoisted weight preprocessing (done ONCE, not per forward call):
    spectral norm, (kh,kw,cin)->rows reshape, 128-padding of K and Cout, bf16 cast."""
    prepared = []
    for p in params:
        w = p["w"]  # (Cout, Cin, KH, KW)
        cout, cin = w.shape[0], w.shape[1]
        # TODO(synk): exact sigma_max here instead of PyTorch's 1-step power iteration.
        sigma = jnp.linalg.norm(w.reshape(cout, -1), ord=2)
        w_sn = w / sigma
        K = KH * KW * cin
        K_pad = _round_up(K, 128)
        C_pad = _round_up(cout, 128)
        w_mat = jnp.transpose(w_sn, (2, 3, 1, 0)).reshape(K, cout)
        w_mat = jnp.pad(w_mat, ((0, K_pad - K), (0, C_pad - cout))).astype(jnp.bfloat16)
        b_mat = jnp.pad(p["b"], (0, C_pad - cout)).reshape(1, C_pad).astype(jnp.float32)
        prepared.append(dict(w_mat=w_mat, b_mat=b_mat, cout=cout,
                             stride=p["stride"], act=p["act"]))
    return prepared


def discriminator_forward(x_nchw, prepared):
    x = jnp.transpose(x_nchw, (0, 2, 3, 1))  # NCHW -> NHWC
    for layer in prepared:
        x = conv2d_layer(x, layer, pad=1)
    return jnp.transpose(x, (0, 3, 1, 2))  # NHWC -> NCHW


# --------------------------------- main -------------------------------------
if __name__ == "__main__":
    key = jax.random.PRNGKey(0)
    kx, kp = jax.random.split(key)

    # small, module-consistent shapes: batch=2, input_nc=3, spatial=32, ndf=8
    # (32 is the smallest spatial size for which every conv produces >=1 output pixel)
    input_nc, ndf, n_layers = 3, 8, 3
    x = jax.random.normal(kx, (2, input_nc, 32, 32), jnp.float32)

    params = build_params(kp, input_nc=input_nc, ndf=ndf, n_layers=n_layers,
                          use_bias=False)  # norm_layer == BatchNorm2d
    prepared = prepare_params(params)      # hoisted spectral norm / reshape / pad / bf16

    fwd = jax.jit(lambda inp: discriminator_forward(inp, prepared))
    out = jax.block_until_ready(fwd(x))

    # PatchGAN output for 32x32 input: 32 -> 16 -> 8 -> 4 -> 3 -> 2
    assert out.shape == (2, 1, 2, 2), out.shape
    assert bool(jnp.all(jnp.isfinite(out)))
    print("KERNEL_OK")
</pallas_src>

<mosaic_0001>
module attributes {stable_mosaic.version = 11 : i64} {
  func.func @_conv_mm_kernel(%arg0: i32, %arg1: i32, %arg2: memref<256x128xbf16, #tpu.memory_space<vmem>>, %arg3: memref<128x128xbf16, #tpu.memory_space<vmem>>, %arg4: memref<1x128xf32, #tpu.memory_space<vmem>>, %arg5: memref<256x128xf32, #tpu.memory_space<vmem>>, %arg6: memref<256x128xf32, #tpu.memory_space<vmem>>) attributes {dimension_semantics = [#tpu.dimension_semantics<parallel>, #tpu.dimension_semantics<arbitrary>], iteration_bounds = array<i64: 2, 1>, scalar_prefetch = 0 : i64, scratch_operands = 1 : i64, tpu.core_type = #tpu.core_type<tc>, window_params = [{transform_indices = @transform_0, window_bounds = array<i64: 256, 128>}, {transform_indices = @transform_1, window_bounds = array<i64: 128, 128>}, {pipeline_mode = #tpu.pipeline_mode<synchronous>, transform_indices = @transform_2, window_bounds = array<i64: 1, 128>}, {transform_indices = @transform_3, window_bounds = array<i64: 256, 128>}]} {
    %c0_i32 = arith.constant 0 : i32
    %0 = arith.cmpi eq, %arg1, %c0_i32 : i32
    %1 = arith.extui %0 : i1 to i32
    %c0_i32_0 = arith.constant 0 : i32
    %2 = arith.cmpi ne, %1, %c0_i32_0 : i32
    scf.if %2 {
      %cst_10 = arith.constant 0.000000e+00 : f32
      %12 = vector.broadcast %cst_10 : f32 to vector<256x128xf32>
      %c0_11 = arith.constant 0 : index
      %c0_12 = arith.constant 0 : index
      %13 = vector.load %arg6[%c0_11, %c0_12] : memref<256x128xf32, #tpu.memory_space<vmem>>, vector<256x128xf32>
      tpu.vector_store %arg6[%c0_11, %c0_12], %12 {strides = array<i32>} : memref<256x128xf32, #tpu.memory_space<vmem>>, vector<256x128xf32>,
    } else {
    }
    %c0 = arith.constant 0 : index
    %c0_1 = arith.constant 0 : index
    %3 = vector.load %arg6[%c0, %c0_1] : memref<256x128xf32, #tpu.memory_space<vmem>>, vector<256x128xf32>
    %c0_2 = arith.constant 0 : index
    %c0_3 = arith.constant 0 : index
    %4 = vector.load %arg2[%c0_2, %c0_3] : memref<256x128xbf16, #tpu.memory_space<vmem>>, vector<256x128xbf16>
    %c0_4 = arith.constant 0 : index
    %c0_5 = arith.constant 0 : index
    %5 = vector.load %arg3[%c0_4, %c0_5] : memref<128x128xbf16, #tpu.memory_space<vmem>>, vector<128x128xbf16>
    %cst = arith.constant dense<0.000000e+00> : vector<256x128xf32>
    %6 = tpu.matmul %4, %5, %cst {dimension_numbers = #tpu.dot_dimension_numbers<[1], [0], [0], [1], [0, 0, 1, 1], [], []>} : vector<256x128xbf16>, vector<128x128xbf16>, vector<256x128xf32> -> vector<256x128xf32>
    %7 = arith.addf %3, %6 : vector<256x128xf32>
    %c0_6 = arith.constant 0 : index
    %c0_7 = arith.constant 0 : index
    %8 = vector.load %arg6[%c0_6, %c0_7] : memref<256x128xf32, #tpu.memory_space<vmem>>, vector<256x128xf32>
    tpu.vector_store %arg6[%c0_6, %c0_7], %7 {strides = array<i32>} : memref<256x128xf32, #tpu.memory_space<vmem>>, vector<256x128xf32>,
    %c0_i32_8 = arith.constant 0 : i32
    %9 = arith.cmpi eq, %arg1, %c0_i32_8 : i32
    %10 = arith.extui %9 : i1 to i32
    %c0_i32_9 = arith.constant 0 : i32
    %11 = arith.cmpi ne, %10, %c0_i32_9 : i32
    scf.if %11 {
      %c0_10 = arith.constant 0 : index
      %c0_11 = arith.constant 0 : index
      %12 = vector.load %arg6[%c0_10, %c0_11] : memref<256x128xf32, #tpu.memory_space<vmem>>, vector<256x128xf32>
      %c0_12 = arith.constant 0 : index
      %c0_13 = arith.constant 0 : index
      %13 = vector.load %arg4[%c0_12, %c0_13] : memref<1x128xf32, #tpu.memory_space<vmem>>, vector<1x128xf32>
      %14 = vector.broadcast %13 : vector<1x128xf32> to vector<256x128xf32>
      %15 = arith.addf %12, %14 : vector<256x128xf32>
      %cst_14 = arith.constant 0.000000e+00 : f32
      %16 = vector.broadcast %cst_14 : f32 to vector<256x128xf32>
      %17 = arith.cmpf oge, %15, %16 : vector<256x128xf32>
      %cst_15 = arith.constant 2.000000e-01 : f32
      %18 = vector.broadcast %cst_15 : f32 to vector<256x128xf32>
      %19 = arith.mulf %18, %15 : vector<256x128xf32>
      %20 = arith.select %17, %15, %19 : vector<256x128xi1>, vector<256x128xf32>
      %c0_16 = arith.constant 0 : index
      %c0_17 = arith.constant 0 : index
      %21 = vector.load %arg5[%c0_16, %c0_17] : memref<256x128xf32, #tpu.memory_space<vmem>>, vector<256x128xf32>
      tpu.vector_store %arg5[%c0_16, %c0_17], %20 {strides = array<i32>} : memref<256x128xf32, #tpu.memory_space<vmem>>, vector<256x128xf32>,
    } else {
    }
    return
  }
  func.func @transform_0(%arg0: i32, %arg1: i32) -> (i32, i32) {
    %c0_i32 = arith.constant 0 : i32
    return %arg0, %arg1 : i32, i32
  }
  func.func @transform_1(%arg0: i32, %arg1: i32) -> (i32, i32) {
    %c0_i32 = arith.constant 0 : i32
    %c0_i32_0 = arith.constant 0 : i32
    return %arg1, %c0_i32 : i32, i32
  }
  func.func @transform_2(%arg0: i32, %arg1: i32) -> (i32, i32) {
    %c0_i32 = arith.constant 0 : i32
    %c0_i32_0 = arith.constant 0 : i32
    %c0_i32_1 = arith.constant 0 : i32
    return %c0_i32, %c0_i32_0 : i32, i32
  }
  func.func @transform_3(%arg0: i32, %arg1: i32) -> (i32, i32) {
    %c0_i32 = arith.constant 0 : i32
    %c0_i32_0 = arith.constant 0 : i32
    return %arg0, %c0_i32 : i32, i32
  }
}

module attributes {stable_mosaic.version = 11 : i64} {
  func.func @_conv_mm_kernel(%arg0: i32, %arg1: i32, %arg2: memref<128x128xbf16, #tpu.memory_space<vmem>>, %arg3: memref<128x128xbf16, #tpu.memory_space<vmem>>, %arg4: memref<1x128xf32, #tpu.memory_space<vmem>>, %arg5: memref<128x128xf32, #tpu.memory_space<vmem>>, %arg6: memref<128x128xf32, #tpu.memory_space<vmem>>) attributes {dimension_semantics = [#tpu.dimension_semantics<parallel>, #tpu.dimension_semantics<arbitrary>], iteration_bounds = array<i64: 1, 1>, scalar_prefetch = 0 : i64, scratch_operands = 1 : i64, tpu.core_type = #tpu.core_type<tc>, window_params = [{transform_indices = @transform_0, window_bounds = array<i64: 128, 128>}, {transform_indices = @transform_1, window_bounds = array<i64: 128, 128>}, {pipeline_mode = #tpu.pipeline_mode<synchronous>, transform_indices = @transform_2, window_bounds = array<i64: 1, 128>}, {transform_indices = @transform_3, window_bounds = array<i64: 128, 128>}]} {
    %c0_i32 = arith.constant 0 : i32
    %0 = arith.cmpi eq, %arg1, %c0_i32 : i32
    %1 = arith.extui %0 : i1 to i32
    %c0_i32_0 = arith.constant 0 : i32
    %2 = arith.cmpi ne, %1, %c0_i32_0 : i32
    scf.if %2 {
      %cst_10 = arith.constant 0.000000e+00 : f32
      %12 = vector.broadcast %cst_10 : f32 to vector<128x128xf32>
      %c0_11 = arith.constant 0 : index
      %c0_12 = arith.constant 0 : index
      %13 = vector.load %arg6[%c0_11, %c0_12] : memref<128x128xf32, #tpu.memory_space<vmem>>, vector<128x128xf32>
      tpu.vector_store %arg6[%c0_11, %c0_12], %12 {strides = array<i32>} : memref<128x128xf32, #tpu.memory_space<vmem>>, vector<128x128xf32>,
    } else {
    }
    %c0 = arith.constant 0 : index
    %c0_1 = arith.constant 0 : index
    %3 = vector.load %arg6[%c0, %c0_1] : memref<128x128xf32, #tpu.memory_space<vmem>>, vector<128x128xf32>
    %c0_2 = arith.constant 0 : index
    %c0_3 = arith.constant 0 : index
    %4 = vector.load %arg2[%c0_2, %c0_3] : memref<128x128xbf16, #tpu.memory_space<vmem>>, vector<128x128xbf16>
    %c0_4 = arith.constant 0 : index
    %c0_5 = arith.constant 0 : index
    %5 = vector.load %arg3[%c0_4, %c0_5] : memref<128x128xbf16, #tpu.memory_space<vmem>>, vector<128x128xbf16>
    %cst = arith.constant dense<0.000000e+00> : vector<128x128xf32>
    %6 = tpu.matmul %4, %5, %cst {dimension_numbers = #tpu.dot_dimension_numbers<[1], [0], [0], [1], [0, 0, 1, 1], [], []>} : vector<128x128xbf16>, vector<128x128xbf16>, vector<128x128xf32> -> vector<128x128xf32>
    %7 = arith.addf %3, %6 : vector<128x128xf32>
    %c0_6 = arith.constant 0 : index
    %c0_7 = arith.constant 0 : index
    %8 = vector.load %arg6[%c0_6, %c0_7] : memref<128x128xf32, #tpu.memory_space<vmem>>, vector<128x128xf32>
    tpu.vector_store %arg6[%c0_6, %c0_7], %7 {strides = array<i32>} : memref<128x128xf32, #tpu.memory_space<vmem>>, vector<128x128xf32>,
    %c0_i32_8 = arith.constant 0 : i32
    %9 = arith.cmpi eq, %arg1, %c0_i32_8 : i32
    %10 = arith.extui %9 : i1 to i32
    %c0_i32_9 = arith.constant 0 : i32
    %11 = arith.cmpi ne, %10, %c0_i32_9 : i32
    scf.if %11 {
      %c0_10 = arith.constant 0 : index
      %c0_11 = arith.constant 0 : index
      %12 = vector.load %arg6[%c0_10, %c0_11] : memref<128x128xf32, #tpu.memory_space<vmem>>, vector<128x128xf32>
      %c0_12 = arith.constant 0 : index
      %c0_13 = arith.constant 0 : index
      %13 = vector.load %arg4[%c0_12, %c0_13] : memref<1x128xf32, #tpu.memory_space<vmem>>, vector<1x128xf32>
      %14 = vector.broadcast %13 : vector<1x128xf32> to vector<128x128xf32>
      %15 = arith.addf %12, %14 : vector<128x128xf32>
      %cst_14 = arith.constant 0.000000e+00 : f32
      %16 = vector.broadcast %cst_14 : f32 to vector<128x128xf32>
      %17 = arith.cmpf oge, %15, %16 : vector<128x128xf32>
      %cst_15 = arith.constant 2.000000e-01 : f32
      %18 = vector.broadcast %cst_15 : f32 to vector<128x128xf32>
      %19 = arith.mulf %18, %15 : vector<128x128xf32>
      %20 = arith.select %17, %15, %19 : vector<128x128xi1>, vector<128x128xf32>
      %c0_16 = arith.constant 0 : index
      %c0_17 = arith.constant 0 : index
      %21 = vector.load %arg5[%c0_16, %c0_17] : memref<128x128xf32, #tpu.memory_space<vmem>>, vector<128x128xf32>
      tpu.vector_store %arg5[%c0_16, %c0_17], %20 {strides = array<i32>} : memref<128x128xf32, #tpu.memory_space<vmem>>, vector<128x128xf32>,
    } else {
    }
    return
  }
  func.func @transform_0(%arg0: i32, %arg1: i32) -> (i32, i32) {
    %c0_i32 = arith.constant 0 : i32
    return %arg0, %arg1 : i32, i32
  }
  func.func @transform_1(%arg0: i32, %arg1: i32) -> (i32, i32) {
    %c0_i32 = arith.constant 0 : i32
    %c0_i32_0 = arith.constant 0 : i32
    return %arg1, %c0_i32 : i32, i32
  }
  func.func @transform_2(%arg0: i32, %arg1: i32) -> (i32, i32) {
    %c0_i32 = arith.constant 0 : i32
    %c0_i32_0 = arith.constant 0 : i32
    %c0_i32_1 = arith.constant 0 : i32
    return %c0_i32, %c0_i32_0 : i32, i32
  }
  func.func @transform_3(%arg0: i32, %arg1: i32) -> (i32, i32) {
    %c0_i32 = arith.constant 0 : i32
    %c0_i32_0 = arith.constant 0 : i32
    return %arg0, %c0_i32 : i32, i32
  }
}

module attributes {stable_mosaic.version = 11 : i64} {
  func.func @_conv_mm_kernel(%arg0: i32, %arg1: i32, %arg2: memref<32x256xbf16, #tpu.memory_space<vmem>>, %arg3: memref<256x128xbf16, #tpu.memory_space<vmem>>, %arg4: memref<1x128xf32, #tpu.memory_space<vmem>>, %arg5: memref<32x128xf32, #tpu.memory_space<vmem>>, %arg6: memref<32x128xf32, #tpu.memory_space<vmem>>) attributes {dimension_semantics = [#tpu.dimension_semantics<parallel>, #tpu.dimension_semantics<arbitrary>], iteration_bounds = array<i64: 1, 1>, scalar_prefetch = 0 : i64, scratch_operands = 1 : i64, tpu.core_type = #tpu.core_type<tc>, window_params = [{transform_indices = @transform_0, window_bounds = array<i64: 32, 256>}, {transform_indices = @transform_1, window_bounds = array<i64: 256, 128>}, {pipeline_mode = #tpu.pipeline_mode<synchronous>, transform_indices = @transform_2, window_bounds = array<i64: 1, 128>}, {transform_indices = @transform_3, window_bounds = array<i64: 32, 128>}]} {
    %c0_i32 = arith.constant 0 : i32
    %0 = arith.cmpi eq, %arg1, %c0_i32 : i32
    %1 = arith.extui %0 : i1 to i32
    %c0_i32_0 = arith.constant 0 : i32
    %2 = arith.cmpi ne, %1, %c0_i32_0 : i32
    scf.if %2 {
      %cst_10 = arith.constant 0.000000e+00 : f32
      %12 = vector.broadcast %cst_10 : f32 to vector<32x128xf32>
      %c0_11 = arith.constant 0 : index
      %c0_12 = arith.constant 0 : index
      %13 = vector.load %arg6[%c0_11, %c0_12] : memref<32x128xf32, #tpu.memory_space<vmem>>, vector<32x128xf32>
      tpu.vector_store %arg6[%c0_11, %c0_12], %12 {strides = array<i32>} : memref<32x128xf32, #tpu.memory_space<vmem>>, vector<32x128xf32>,
    } else {
    }
    %c0 = arith.constant 0 : index
    %c0_1 = arith.constant 0 : index
    %3 = vector.load %arg6[%c0, %c0_1] : memref<32x128xf32, #tpu.memory_space<vmem>>, vector<32x128xf32>
    %c0_2 = arith.constant 0 : index
    %c0_3 = arith.constant 0 : index
    %4 = vector.load %arg2[%c0_2, %c0_3] : memref<32x256xbf16, #tpu.memory_space<vmem>>, vector<32x256xbf16>
    %c0_4 = arith.constant 0 : index
    %c0_5 = arith.constant 0 : index
    %5 = vector.load %arg3[%c0_4, %c0_5] : memref<256x128xbf16, #tpu.memory_space<vmem>>, vector<256x128xbf16>
    %cst = arith.constant dense<0.000000e+00> : vector<32x128xf32>
    %6 = tpu.matmul %4, %5, %cst {dimension_numbers = #tpu.dot_dimension_numbers<[1], [0], [0], [1], [0, 0, 1, 1], [], []>} : vector<32x256xbf16>, vector<256x128xbf16>, vector<32x128xf32> -> vector<32x128xf32>
    %7 = arith.addf %3, %6 : vector<32x128xf32>
    %c0_6 = arith.constant 0 : index
    %c0_7 = arith.constant 0 : index
    %8 = vector.load %arg6[%c0_6, %c0_7] : memref<32x128xf32, #tpu.memory_space<vmem>>, vector<32x128xf32>
    tpu.vector_store %arg6[%c0_6, %c0_7], %7 {strides = array<i32>} : memref<32x128xf32, #tpu.memory_space<vmem>>, vector<32x128xf32>,
    %c0_i32_8 = arith.constant 0 : i32
    %9 = arith.cmpi eq, %arg1, %c0_i32_8 : i32
    %10 = arith.extui %9 : i1 to i32
    %c0_i32_9 = arith.constant 0 : i32
    %11 = arith.cmpi ne, %10, %c0_i32_9 : i32
    scf.if %11 {
      %c0_10 = arith.constant 0 : index
      %c0_11 = arith.constant 0 : index
      %12 = vector.load %arg6[%c0_10, %c0_11] : memref<32x128xf32, #tpu.memory_space<vmem>>, vector<32x128xf32>
      %c0_12 = arith.constant 0 : index
      %c0_13 = arith.constant 0 : index
      %13 = vector.load %arg4[%c0_12, %c0_13] : memref<1x128xf32, #tpu.memory_space<vmem>>, vector<1x128xf32>
      %14 = vector.broadcast %13 : vector<1x128xf32> to vector<32x128xf32>
      %15 = arith.addf %12, %14 : vector<32x128xf32>
      %cst_14 = arith.constant 0.000000e+00 : f32
      %16 = vector.broadcast %cst_14 : f32 to vector<32x128xf32>
      %17 = arith.cmpf oge, %15, %16 : vector<32x128xf32>
      %cst_15 = arith.constant 2.000000e-01 : f32
      %18 = vector.broadcast %cst_15 : f32 to vector<32x128xf32>
      %19 = arith.mulf %18, %15 : vector<32x128xf32>
      %20 = arith.select %17, %15, %19 : vector<32x128xi1>, vector<32x128xf32>
      %c0_16 = arith.constant 0 : index
      %c0_17 = arith.constant 0 : index
      %21 = vector.load %arg5[%c0_16, %c0_17] : memref<32x128xf32, #tpu.memory_space<vmem>>, vector<32x128xf32>
      tpu.vector_store %arg5[%c0_16, %c0_17], %20 {strides = array<i32>} : memref<32x128xf32, #tpu.memory_space<vmem>>, vector<32x128xf32>,
    } else {
    }
    return
  }
  func.func @transform_0(%arg0: i32, %arg1: i32) -> (i32, i32) {
    %c0_i32 = arith.constant 0 : i32
    return %arg0, %arg1 : i32, i32
  }
  func.func @transform_1(%arg0: i32, %arg1: i32) -> (i32, i32) {
    %c0_i32 = arith.constant 0 : i32
    %c0_i32_0 = arith.constant 0 : i32
    return %arg1, %c0_i32 : i32, i32
  }
  func.func @transform_2(%arg0: i32, %arg1: i32) -> (i32, i32) {
    %c0_i32 = arith.constant 0 : i32
    %c0_i32_0 = arith.constant 0 : i32
    %c0_i32_1 = arith.constant 0 : i32
    return %c0_i32, %c0_i32_0 : i32, i32
  }
  func.func @transform_3(%arg0: i32, %arg1: i32) -> (i32, i32) {
    %c0_i32 = arith.constant 0 : i32
    %c0_i32_0 = arith.constant 0 : i32
    return %arg0, %c0_i32 : i32, i32
  }
}

module attributes {stable_mosaic.version = 11 : i64} {
  func.func @_conv_mm_kernel(%arg0: i32, %arg1: i32, %arg2: memref<24x512xbf16, #tpu.memory_space<vmem>>, %arg3: memref<512x128xbf16, #tpu.memory_space<vmem>>, %arg4: memref<1x128xf32, #tpu.memory_space<vmem>>, %arg5: memref<24x128xf32, #tpu.memory_space<vmem>>, %arg6: memref<24x128xf32, #tpu.memory_space<vmem>>) attributes {dimension_semantics = [#tpu.dimension_semantics<parallel>, #tpu.dimension_semantics<arbitrary>], iteration_bounds = array<i64: 1, 1>, scalar_prefetch = 0 : i64, scratch_operands = 1 : i64, tpu.core_type = #tpu.core_type<tc>, window_params = [{transform_indices = @transform_0, window_bounds = array<i64: 24, 512>}, {transform_indices = @transform_1, window_bounds = array<i64: 512, 128>}, {pipeline_mode = #tpu.pipeline_mode<synchronous>, transform_indices = @transform_2, window_bounds = array<i64: 1, 128>}, {transform_indices = @transform_3, window_bounds = array<i64: 24, 128>}]} {
    %c0_i32 = arith.constant 0 : i32
    %0 = arith.cmpi eq, %arg1, %c0_i32 : i32
    %1 = arith.extui %0 : i1 to i32
    %c0_i32_0 = arith.constant 0 : i32
    %2 = arith.cmpi ne, %1, %c0_i32_0 : i32
    scf.if %2 {
      %cst_10 = arith.constant 0.000000e+00 : f32
      %12 = vector.broadcast %cst_10 : f32 to vector<24x128xf32>
      %c0_11 = arith.constant 0 : index
      %c0_12 = arith.constant 0 : index
      %13 = vector.load %arg6[%c0_11, %c0_12] : memref<24x128xf32, #tpu.memory_space<vmem>>, vector<24x128xf32>
      tpu.vector_store %arg6[%c0_11, %c0_12], %12 {strides = array<i32>} : memref<24x128xf32, #tpu.memory_space<vmem>>, vector<24x128xf32>,
    } else {
    }
    %c0 = arith.constant 0 : index
    %c0_1 = arith.constant 0 : index
    %3 = vector.load %arg6[%c0, %c0_1] : memref<24x128xf32, #tpu.memory_space<vmem>>, vector<24x128xf32>
    %c0_2 = arith.constant 0 : index
    %c0_3 = arith.constant 0 : index
    %4 = vector.load %arg2[%c0_2, %c0_3] : memref<24x512xbf16, #tpu.memory_space<vmem>>, vector<24x512xbf16>
    %c0_4 = arith.constant 0 : index
    %c0_5 = arith.constant 0 : index
    %5 = vector.load %arg3[%c0_4, %c0_5] : memref<512x128xbf16, #tpu.memory_space<vmem>>, vector<512x128xbf16>
    %cst = arith.constant dense<0.000000e+00> : vector<24x128xf32>
    %6 = tpu.matmul %4, %5, %cst {dimension_numbers = #tpu.dot_dimension_numbers<[1], [0], [0], [1], [0, 0, 1, 1], [], []>} : vector<24x512xbf16>, vector<512x128xbf16>, vector<24x128xf32> -> vector<24x128xf32>
    %7 = arith.addf %3, %6 : vector<24x128xf32>
    %c0_6 = arith.constant 0 : index
    %c0_7 = arith.constant 0 : index
    %8 = vector.load %arg6[%c0_6, %c0_7] : memref<24x128xf32, #tpu.memory_space<vmem>>, vector<24x128xf32>
    tpu.vector_store %arg6[%c0_6, %c0_7], %7 {strides = array<i32>} : memref<24x128xf32, #tpu.memory_space<vmem>>, vector<24x128xf32>,
    %c0_i32_8 = arith.constant 0 : i32
    %9 = arith.cmpi eq, %arg1, %c0_i32_8 : i32
    %10 = arith.extui %9 : i1 to i32
    %c0_i32_9 = arith.constant 0 : i32
    %11 = arith.cmpi ne, %10, %c0_i32_9 : i32
    scf.if %11 {
      %c0_10 = arith.constant 0 : index
      %c0_11 = arith.constant 0 : index
      %12 = vector.load %arg6[%c0_10, %c0_11] : memref<24x128xf32, #tpu.memory_space<vmem>>, vector<24x128xf32>
      %c0_12 = arith.constant 0 : index
      %c0_13 = arith.constant 0 : index
      %13 = vector.load %arg4[%c0_12, %c0_13] : memref<1x128xf32, #tpu.memory_space<vmem>>, vector<1x128xf32>
      %14 = vector.broadcast %13 : vector<1x128xf32> to vector<24x128xf32>
      %15 = arith.addf %12, %14 : vector<24x128xf32>
      %cst_14 = arith.constant 0.000000e+00 : f32
      %16 = vector.broadcast %cst_14 : f32 to vector<24x128xf32>
      %17 = arith.cmpf oge, %15, %16 : vector<24x128xf32>
      %cst_15 = arith.constant 2.000000e-01 : f32
      %18 = vector.broadcast %cst_15 : f32 to vector<24x128xf32>
      %19 = arith.mulf %18, %15 : vector<24x128xf32>
      %20 = arith.select %17, %15, %19 : vector<24x128xi1>, vector<24x128xf32>
      %c0_16 = arith.constant 0 : index
      %c0_17 = arith.constant 0 : index
      %21 = vector.load %arg5[%c0_16, %c0_17] : memref<24x128xf32, #tpu.memory_space<vmem>>, vector<24x128xf32>
      tpu.vector_store %arg5[%c0_16, %c0_17], %20 {strides = array<i32>} : memref<24x128xf32, #tpu.memory_space<vmem>>, vector<24x128xf32>,
    } else {
    }
    return
  }
  func.func @transform_0(%arg0: i32, %arg1: i32) -> (i32, i32) {
    %c0_i32 = arith.constant 0 : i32
    return %arg0, %arg1 : i32, i32
  }
  func.func @transform_1(%arg0: i32, %arg1: i32) -> (i32, i32) {
    %c0_i32 = arith.constant 0 : i32
    %c0_i32_0 = arith.constant 0 : i32
    return %arg1, %c0_i32 : i32, i32
  }
  func.func @transform_2(%arg0: i32, %arg1: i32) -> (i32, i32) {
    %c0_i32 = arith.constant 0 : i32
    %c0_i32_0 = arith.constant 0 : i32
    %c0_i32_1 = arith.constant 0 : i32
    return %c0_i32, %c0_i32_0 : i32, i32
  }
  func.func @transform_3(%arg0: i32, %arg1: i32) -> (i32, i32) {
    %c0_i32 = arith.constant 0 : i32
    %c0_i32_0 = arith.constant 0 : i32
    return %arg0, %c0_i32 : i32, i32
  }
}

module attributes {stable_mosaic.version = 11 : i64} {
  func.func @_conv_mm_kernel(%arg0: i32, %arg1: i32, %arg2: memref<8x512xbf16, #tpu.memory_space<vmem>>, %arg3: memref<512x128xbf16, #tpu.memory_space<vmem>>, %arg4: memref<1x128xf32, #tpu.memory_space<vmem>>, %arg5: memref<8x128xf32, #tpu.memory_space<vmem>>, %arg6: memref<8x128xf32, #tpu.memory_space<vmem>>) attributes {dimension_semantics = [#tpu.dimension_semantics<parallel>, #tpu.dimension_semantics<arbitrary>], iteration_bounds = array<i64: 1, 2>, scalar_prefetch = 0 : i64, scratch_operands = 1 : i64, tpu.core_type = #tpu.core_type<tc>, window_params = [{transform_indices = @transform_0, window_bounds = array<i64: 8, 512>}, {transform_indices = @transform_1, window_bounds = array<i64: 512, 128>}, {pipeline_mode = #tpu.pipeline_mode<synchronous>, transform_indices = @transform_2, window_bounds = array<i64: 1, 128>}, {transform_indices = @transform_3, window_bounds = array<i64: 8, 128>}]} {
    %c0_i32 = arith.constant 0 : i32
    %0 = arith.cmpi eq, %arg1, %c0_i32 : i32
    %1 = arith.extui %0 : i1 to i32
    %c0_i32_0 = arith.constant 0 : i32
    %2 = arith.cmpi ne, %1, %c0_i32_0 : i32
    scf.if %2 {
      %cst_9 = arith.constant 0.000000e+00 : f32
      %12 = vector.broadcast %cst_9 : f32 to vector<8x128xf32>
      %c0_10 = arith.constant 0 : index
      %c0_11 = arith.constant 0 : index
      %13 = vector.load %arg6[%c0_10, %c0_11] : memref<8x128xf32, #tpu.memory_space<vmem>>, vector<8x128xf32>
      tpu.vector_store %arg6[%c0_10, %c0_11], %12 {strides = array<i32>} : memref<8x128xf32, #tpu.memory_space<vmem>>, vector<8x128xf32>,
    } else {
    }
    %c0 = arith.constant 0 : index
    %c0_1 = arith.constant 0 : index
    %3 = vector.load %arg6[%c0, %c0_1] : memref<8x128xf32, #tpu.memory_space<vmem>>, vector<8x128xf32>
    %c0_2 = arith.constant 0 : index
    %c0_3 = arith.constant 0 : index
    %4 = vector.load %arg2[%c0_2, %c0_3] : memref<8x512xbf16, #tpu.memory_space<vmem>>, vector<8x512xbf16>
    %c0_4 = arith.constant 0 : index
    %c0_5 = arith.constant 0 : index
    %5 = vector.load %arg3[%c0_4, %c0_5] : memref<512x128xbf16, #tpu.memory_space<vmem>>, vector<512x128xbf16>
    %cst = arith.constant dense<0.000000e+00> : vector<8x128xf32>
    %6 = tpu.matmul %4, %5, %cst {dimension_numbers = #tpu.dot_dimension_numbers<[1], [0], [0], [1], [0, 0, 1, 1], [], []>} : vector<8x512xbf16>, vector<512x128xbf16>, vector<8x128xf32> -> vector<8x128xf32>
    %7 = arith.addf %3, %6 : vector<8x128xf32>
    %c0_6 = arith.constant 0 : index
    %c0_7 = arith.constant 0 : index
    %8 = vector.load %arg6[%c0_6, %c0_7] : memref<8x128xf32, #tpu.memory_space<vmem>>, vector<8x128xf32>
    tpu.vector_store %arg6[%c0_6, %c0_7], %7 {strides = array<i32>} : memref<8x128xf32, #tpu.memory_space<vmem>>, vector<8x128xf32>,
    %c1_i32 = arith.constant 1 : i32
    %9 = arith.cmpi eq, %arg1, %c1_i32 : i32
    %10 = arith.extui %9 : i1 to i32
    %c0_i32_8 = arith.constant 0 : i32
    %11 = arith.cmpi ne, %10, %c0_i32_8 : i32
    scf.if %11 {
      %c0_9 = arith.constant 0 : index
      %c0_10 = arith.constant 0 : index
      %12 = vector.load %arg6[%c0_9, %c0_10] : memref<8x128xf32, #tpu.memory_space<vmem>>, vector<8x128xf32>
      %c0_11 = arith.constant 0 : index
      %c0_12 = arith.constant 0 : index
      %13 = vector.load %arg4[%c0_11, %c0_12] : memref<1x128xf32, #tpu.memory_space<vmem>>, vector<1x128xf32>
      %14 = vector.broadcast %13 : vector<1x128xf32> to vector<8x128xf32>
      %15 = arith.addf %12, %14 : vector<8x128xf32>
      %c0_13 = arith.constant 0 : index
      %c0_14 = arith.constant 0 : index
      %16 = vector.load %arg5[%c0_13, %c0_14] : memref<8x128xf32, #tpu.memory_space<vmem>>, vector<8x128xf32>
      tpu.vector_store %arg5[%c0_13, %c0_14], %15 {strides = array<i32>} : memref<8x128xf32, #tpu.memory_space<vmem>>, vector<8x128xf32>,
    } else {
    }
    return
  }
  func.func @transform_0(%arg0: i32, %arg1: i32) -> (i32, i32) {
    %c0_i32 = arith.constant 0 : i32
    return %arg0, %arg1 : i32, i32
  }
  func.func @transform_1(%arg0: i32, %arg1: i32) -> (i32, i32) {
    %c0_i32 = arith.constant 0 : i32
    %c0_i32_0 = arith.constant 0 : i32
    return %arg1, %c0_i32 : i32, i32
  }
  func.func @transform_2(%arg0: i32, %arg1: i32) -> (i32, i32) {
    %c0_i32 = arith.constant 0 : i32
    %c0_i32_0 = arith.constant 0 : i32
    %c0_i32_1 = arith.constant 0 : i32
    return %c0_i32, %c0_i32_0 : i32, i32
  }
  func.func @transform_3(%arg0: i32, %arg1: i32) -> (i32, i32) {
    %c0_i32 = arith.constant 0 : i32
    %c0_i32_0 = arith.constant 0 : i32
    return %arg0, %c0_i32 : i32, i32
  }
}

</mosaic_0001>

<llo_original>
// kernel: _lambda_.5
$region0: #{_lambda_.5}
  #allocation0 [shape = 'u32[]', space=smem, size = 0x4, offset = 0x4, fixed_abs, tag = 'smem constant byte address 0x4 - core index']
  #allocation1 [shape = 'u32[144,128]{1,0:T(1,128)}', space=vmem, size = 0x12000, scoped, tag = 'internal scratch']
  #allocation2 [shape = 'f32[256,128]{1,0:T(8,128)}', space=vmem, size = 0x20000, scoped, tag = 'scratch operand']
  %s0 = inlined_call_operand.vmem [shape: bf16[512,128], index: 0, kind: input, shape index: {}]
  %s1 = inlined_call_operand.vmem [shape: bf16[128,128], index: 1, kind: input, shape index: {}]
  %s2 = inlined_call_operand.vmem [shape: f32[1,128], index: 2, kind: input, shape index: {}]
  %s3 = inlined_call_operand.vmem [shape: f32[512,128], index: 3, kind: output, shape index: {}]
  %s4 = sld [smem:[#allocation0]]
  $region53: #{_lambda_.5} parent=0
    _
  %s6 = ssub.s32 1, %s4
  %s7 = scalar_select 0, %s6, %s4
  loop: start=0, step=1, limit=4
  $region2: #{_lambda_.5} parent=0 // loop_pre_header
    _
  $region3: #{_lambda_.5} parent=0 // loop_header
    %s9 = sphi 0, %s13
    %p10 = scmp.ge.s32.totalorder %s9, 4
    %s16 = sphi 0, %s28
    %s17 = sphi 0, %s24
    %s18 = sphi 0, %s16
    %s19 = sphi 0, %s17
    %s20 = sphi 0, %s18
    %s21 = sphi 0, %s19
    %s33 = sphi 0, %s35
    %s36 = sphi 0, %s33
    %s37 = sphi 0, %s36
    %s53 = sphi 0, %s37
    %s59 = sphi 0, %s61
    %s62 = sphi 0, %s59
    %s63 = sphi 0, %s62
    %s79 = sphi 0, %s63
    %s83 = sphi 0, %s83
    %s85 = sphi 0, %s83
    %s86 = sphi 0, %s85
    %s100 = sphi 0, %s86
    %s106 = sphi 0, %s108
    %s109 = sphi 0, %s106
    %s110 = sphi 0, %s109
    %s126 = sphi 0, %s110
  $region4: #{_lambda_.5} parent=0 // loop_header_branch
    %12 = sbr.rel (%p10) target = $region8
  $region5: #{_lambda_.5} parent=0 // loop_body
    %s14 = ssub.s32 %s9, 1
    %s15 = ssub.s32 %s9, 2
    %s22 = sadd.s32 1, %s17
    %p23 = scmp.ge.s32.totalorder %s22, 1
    %s24 = scalar_select %p23, 0, %s22
    %s25 = sadd.s32 1, %s16
    %s26 = scalar_select %p23, %s25, %s16
    %p27 = scmp.ge.s32.totalorder %s26, 2
    %s28 = scalar_select %p27, 0, %s26
    %s29 = ssub.s32 %s16, %s28
    %s30 = ssub.s32 %s17, %s24
    %s31 = sor.u32 %s29, %s30
    %p32 = scmp.eq.s32.totalorder %s31, 0
    %s34 = sadd.s32 %s33, 1
    %s35 = scalar_select %p32, %s33, %s34
    %p38 = pneg %p32
    %p39 = scmp.eq.s32.totalorder %s9, 1
    %p40 = por %p38, %p39
    %p41 = scmp.ne.s32.totalorder %s33, %s36
    %p42 = scmp.eq.s32.totalorder %s9, 0
    %p43 = por %p41, %p42
    %p44 = scmp.ne.s32.totalorder %s33, %s36
    %p45 = scmp.eq.s32.totalorder %s14, 1
    %p46 = por %p44, %p45
    %p47 = scmp.ne.s32.totalorder %s36, %s37
    %p48 = scmp.eq.s32.totalorder %s14, 0
    %p49 = por %p47, %p48
    %p50 = scmp.ne.s32.totalorder %s36, %s37
    %p51 = scmp.eq.s32.totalorder %s15, 1
    %p52 = por %p50, %p51
    %p54 = scmp.ne.s32.totalorder %s37, %s53
    %p55 = scmp.eq.s32.totalorder %s15, 0
    %p56 = por %p54, %p55
    %s57 = ssub.s32 %s17, %s24
    %p58 = scmp.eq.s32.totalorder %s57, 0
    %s60 = sadd.s32 %s59, 1
    %s61 = scalar_select %p58, %s59, %s60
    %p64 = pneg %p58
    %p65 = scmp.eq.s32.totalorder %s9, 1
    %p66 = por %p64, %p65
    %p67 = scmp.ne.s32.totalorder %s59, %s62
    %p68 = scmp.eq.s32.totalorder %s9, 0
    %p69 = por %p67, %p68
    %p70 = scmp.ne.s32.totalorder %s59, %s62
    %p71 = scmp.eq.s32.totalorder %s14, 1
    %p72 = por %p70, %p71
    %p73 = scmp.ne.s32.totalorder %s62, %s63
    %p74 = scmp.eq.s32.totalorder %s14, 0
    %p75 = por %p73, %p74
    %p76 = scmp.ne.s32.totalorder %s62, %s63
    %p77 = scmp.eq.s32.totalorder %s15, 1
    %p78 = por %p76, %p77
    %p80 = scmp.ne.s32.totalorder %s63, %s79
    %p81 = scmp.eq.s32.totalorder %s15, 0
    %p82 = por %p80, %p81
    %s84 = sadd.s32 %s83, 1
    %p87 = scmp.eq.s32.totalorder %s9, 1
    %p88 = scmp.ne.s32.totalorder %s83, %s85
    %p89 = scmp.eq.s32.totalorder %s9, 0
    %p90 = por %p88, %p89
    %p91 = scmp.ne.s32.totalorder %s83, %s85
    %p92 = scmp.eq.s32.totalorder %s14, 1
    %p93 = por %p91, %p92
    %p94 = scmp.ne.s32.totalorder %s85, %s86
    %p95 = scmp.eq.s32.totalorder %s14, 0
    %p96 = por %p94, %p95
    %p97 = scmp.ne.s32.totalorder %s85, %s86
    %p98 = scmp.eq.s32.totalorder %s15, 1
    %p99 = por %p97, %p98
    %p101 = scmp.ne.s32.totalorder %s86, %s100
    %p102 = scmp.eq.s32.totalorder %s15, 0
    %p103 = por %p101, %p102
    %s104 = ssub.s32 %s16, %s28
    %p105 = scmp.eq.s32.totalorder %s104, 0
    %s107 = sadd.s32 %s106, 1
    %s108 = scalar_select %p105, %s106, %s107
    %p111 = pneg %p105
    %p112 = scmp.eq.s32.totalorder %s9, 1
    %p113 = por %p111, %p112
    %p114 = scmp.ne.s32.totalorder %s106, %s109
    %p115 = scmp.eq.s32.totalorder %s9, 0
    %p116 = por %p114, %p115
    %p117 = scmp.ne.s32.totalorder %s106, %s109
    %p118 = scmp.eq.s32.totalorder %s14, 1
    %p119 = por %p117, %p118
    %p120 = scmp.ne.s32.totalorder %s109, %s110
    %p121 = scmp.eq.s32.totalorder %s14, 0
    %p122 = por %p120, %p121
    %p123 = scmp.ne.s32.totalorder %s109, %s110
    %p124 = scmp.eq.s32.totalorder %s15, 1
    %p125 = por %p123, %p124
    %p127 = scmp.ne.s32.totalorder %s110, %s126
    %p128 = scmp.eq.s32.totalorder %s15, 0
    %p129 = por %p127, %p128
    %p130 = scmp.le.s32.totalorder 1, %s9
    %p131 = scmp.lt.s32.totalorder %s9, 3
    %p132 = pnand %p130, %p131
    %p133 = pneg %p132
    // Predicated region
    $region9: #{_lambda_.5} parent=5 // pred_check
      _
    $region10: #{_lambda_.5} parent=5 // pred_check_branch
      %135 = sbr.rel (%p132) target = $region12
    $region11: #{_lambda_.5} parent=5 // pred_region
      %s136 = ssub.s32 %s9, 1
      // Predicated region
      $region13: #{_lambda_.5} parent=11 // pred_check
        %p137 = pneg %p75
      $region14: #{_lambda_.5} parent=11 // pred_check_branch
        %139 = sbr.rel (%p137) target = $region16
      $region15: #{_lambda_.5} parent=11 // pred_region
        %s140 = smul.u32 16, %s19
        %p141 = scmp.lt.s32.totalorder %s140, 15
        %s142 = scalar_select %p141, %s140, 15
        %s143 = smul.addr %s142, 4
        %s144 = scalar_lea.vmem %s1, %s143
        %s145 = smul.u32 16, %s19
      $region16: #{_lambda_.5} parent=11 // pred_fallthru
        _
      // Predicated region
      $region17: #{_lambda_.5} parent=11 // pred_check
        %p146 = pneg %p96
      $region18: #{_lambda_.5} parent=11 // pred_check_branch
        %148 = sbr.rel (%p146) target = $region20
      $region19: #{_lambda_.5} parent=11 // pred_region
        _
      $region20: #{_lambda_.5} parent=11 // pred_fallthru
        _
    $region12: #{_lambda_.5} parent=5 // pred_fallthru
      _
    %p149 = scmp.lt.s32.totalorder %s9, 2
    // Predicated region
    $region21: #{_lambda_.5} parent=5 // pred_check
      %p150 = pneg %p149
    $region22: #{_lambda_.5} parent=5 // pred_check_branch
      %152 = sbr.rel (%p150) target = $region24
    $region23: #{_lambda_.5} parent=5 // pred_region
      // Predicated region
      $region25: #{_lambda_.5} parent=23 // pred_check
        %p153 = pneg %p43
      $region26: #{_lambda_.5} parent=23 // pred_check_branch
        %155 = sbr.rel (%p153) target = $region28
      $region27: #{_lambda_.5} parent=23 // pred_region
        %s156 = smul.u32 32, %s16
        %p157 = scmp.lt.s32.totalorder %s156, 63
        %s158 = scalar_select %p157, %s156, 63
        %p159 = scmp.lt.s32.totalorder %s17, 0
        %s160 = scalar_select %p159, %s17, 0
        %s161 = sadd.s32 %s160, %s158
        %s162 = smul.addr %s161, 4
        %s163 = scalar_lea.vmem %s0, %s162
        %s164 = smul.u32 32, %s16
      $region28: #{_lambda_.5} parent=23 // pred_fallthru
        _
    $region24: #{_lambda_.5} parent=5 // pred_fallthru
      _
    %p165 = scmp.le.s32.totalorder 1, %s9
    %p166 = scmp.lt.s32.totalorder %s9, 3
    %p167 = pnand %p165, %p166
    %p168 = pneg %p167
    // Predicated region
    $region29: #{_lambda_.5} parent=5 // pred_check
      _
    $region30: #{_lambda_.5} parent=5 // pred_check_branch
      %170 = sbr.rel (%p167) target = $region32
    $region31: #{_lambda_.5} parent=5 // pred_region
      %s171 = ssub.s32 %s9, 1
      %s172 = smul.u32 32, %s18
      %p173 = scmp.lt.s32.totalorder %s172, 63
      %s174 = scalar_select %p173, %s172, 63
      %p175 = scmp.lt.s32.totalorder %s19, 0
      %s176 = scalar_select %p175, %s19, 0
      %s177 = sadd.s32 %s176, %s174
      %s178 = smul.addr %s177, 4
      %s179 = scalar_lea.vmem %s0, %s178
      %p180 = pneg %p49
      %p181 = pneg %p46
      %s182 = smul.u32 16, %s19
      %p183 = scmp.lt.s32.totalorder %s182, 15
      %s184 = scalar_select %p183, %s182, 15
      %s185 = smul.addr %s184, 4
      %s186 = scalar_lea.vmem %s1, %s185
      %p187 = pneg %p75
      %p188 = pneg %p72
      %p189 = pneg %p96
      %p190 = pneg %p93
      %p191 = pneg %p122
      %p192 = pneg %p119
      %s193 = smul.u32 32, %s18
      %p194 = scmp.lt.s32.totalorder %s193, 63
      %s195 = scalar_select %p194, %s193, 63
      %s196 = smul.addr %s195, 8
      %s197 = scalar_lea.vmem %s3, %s196
      %s198 = smul.u32 32, %s18
      %p199 = scmp.lt.s32.totalorder %s198, 63
      %s200 = scalar_select %p199, %s198, 63
      %p201 = scmp.lt.s32.totalorder %s19, 0
      %s202 = scalar_select %p201, %s19, 0
      %s203 = sadd.s32 %s202, %s200
      %s204 = smul.addr %s203, 4
      %s205 = scalar_lea.vmem %s0, %s204
      %s206 = smul.u32 32, %s18
      %s207 = smul.u32 16, %s19
      %p208 = scmp.lt.s32.totalorder %s207, 15
      %s209 = scalar_select %p208, %s207, 15
      %s210 = smul.addr %s209, 4
      %s211 = scalar_lea.vmem %s1, %s210
      %s212 = smul.u32 16, %s19
      %s213 = smul.u32 32, %s18
      %p214 = scmp.lt.s32.totalorder %s213, 63
      %s215 = scalar_select %p214, %s213, 63
      %s216 = smul.addr %s215, 8
      %s217 = scalar_lea.vmem %s3, %s216
      %s218 = smul.u32 32, %s18
      %p220 = scmp.eq.s32.totalorder %s19, 0
      // Predicated region
      $region33: #{_lambda_.5} parent=31 // pred_check
        %p221 = pneg %p220
      $region34: #{_lambda_.5} parent=31 // pred_check_branch
        %223 = sbr.rel (%p221) target = $region36
      $region35: #{_lambda_.5} parent=31 // pred_region
        %224 = vst [vmem:[#allocation2] sm:$0xff] 0.0
        %225 = vst [vmem:[#allocation2 + $0x8] sm:$0xff] 0.0
        %226 = vst [vmem:[#allocation2 + $0x10] sm:$0xff] 0.0
        %227 = vst [vmem:[#allocation2 + $0x18] sm:$0xff] 0.0
        %228 = vst [vmem:[#allocation2 + $0x20] sm:$0xff] 0.0
        %229 = vst [vmem:[#allocation2 + $0x28] sm:$0xff] 0.0
        %230 = vst [vmem:[#allocation2 + $0x30] sm:$0xff] 0.0
        %231 = vst [vmem:[#allocation2 + $0x38] sm:$0xff] 0.0
        %232 = vst [vmem:[#allocation2 + $0x40] sm:$0xff] 0.0
        %233 = vst [vmem:[#allocation2 + $0x48] sm:$0xff] 0.0
        %234 = vst [vmem:[#allocation2 + $0x50] sm:$0xff] 0.0
        %235 = vst [vmem:[#allocation2 + $0x58] sm:$0xff] 0.0
        %236 = vst [vmem:[#allocation2 + $0x60] sm:$0xff] 0.0
        %237 = vst [vmem:[#allocation2 + $0x68] sm:$0xff] 0.0
        %238 = vst [vmem:[#allocation2 + $0x70] sm:$0xff] 0.0
        %239 = vst [vmem:[#allocation2 + $0x78] sm:$0xff] 0.0
        %240 = vst [vmem:[#allocation2 + $0x80] sm:$0xff] 0.0
        %241 = vst [vmem:[#allocation2 + $0x88] sm:$0xff] 0.0
        %242 = vst [vmem:[#allocation2 + $0x90] sm:$0xff] 0.0
        %243 = vst [vmem:[#allocation2 + $0x98] sm:$0xff] 0.0
        %244 = vst [vmem:[#allocation2 + $0xa0] sm:$0xff] 0.0
        %245 = vst [vmem:[#allocation2 + $0xa8] sm:$0xff] 0.0
        %246 = vst [vmem:[#allocation2 + $0xb0] sm:$0xff] 0.0
        %247 = vst [vmem:[#allocation2 + $0xb8] sm:$0xff] 0.0
        %248 = vst [vmem:[#allocation2 + $0xc0] sm:$0xff] 0.0
        %249 = vst [vmem:[#allocation2 + $0xc8] sm:$0xff] 0.0
        %250 = vst [vmem:[#allocation2 + $0xd0] sm:$0xff] 0.0
        %251 = vst [vmem:[#allocation2 + $0xd8] sm:$0xff] 0.0
        %252 = vst [vmem:[#allocation2 + $0xe0] sm:$0xff] 0.0
        %253 = vst [vmem:[#allocation2 + $0xe8] sm:$0xff] 0.0
        %254 = vst [vmem:[#allocation2 + $0xf0] sm:$0xff] 0.0
        %255 = vst [vmem:[#allocation2 + $0xf8] sm:$0xff] 0.0
      $region36: #{_lambda_.5} parent=31 // pred_fallthru
        _
      %v256 = vld [vmem:[#allocation2] sm:$0xff]
      %v257 = vld [vmem:[#allocation2 + $0x8] sm:$0xff]
      %v258 = vld [vmem:[#allocation2 + $0x10] sm:$0xff]
      %v259 = vld [vmem:[#allocation2 + $0x18] sm:$0xff]
      %v260 = vld [vmem:[#allocation2 + $0x20] sm:$0xff]
      %v261 = vld [vmem:[#allocation2 + $0x28] sm:$0xff]
      %v262 = vld [vmem:[#allocation2 + $0x30] sm:$0xff]
      %v263 = vld [vmem:[#allocation2 + $0x38] sm:$0xff]
      %v264 = vld [vmem:[#allocation2 + $0x40] sm:$0xff]
      %v265 = vld [vmem:[#allocation2 + $0x48] sm:$0xff]
      %v266 = vld [vmem:[#allocation2 + $0x50] sm:$0xff]
      %v267 = vld [vmem:[#allocation2 + $0x58] sm:$0xff]
      %v268 = vld [vmem:[#allocation2 + $0x60] sm:$0xff]
      %v269 = vld [vmem:[#allocation2 + $0x68] sm:$0xff]
      %v270 = vld [vmem:[#allocation2 + $0x70] sm:$0xff]
      %v271 = vld [vmem:[#allocation2 + $0x78] sm:$0xff]
      %v272 = vld [vmem:[#allocation2 + $0x80] sm:$0xff]
      %v273 = vld [vmem:[#allocation2 + $0x88] sm:$0xff]
      %v274 = vld [vmem:[#allocation2 + $0x90] sm:$0xff]
      %v275 = vld [vmem:[#allocation2 + $0x98] sm:$0xff]
      %v276 = vld [vmem:[#allocation2 + $0xa0] sm:$0xff]
      %v277 = vld [vmem:[#allocation2 + $0xa8] sm:$0xff]
      %v278 = vld [vmem:[#allocation2 + $0xb0] sm:$0xff]
      %v279 = vld [vmem:[#allocation2 + $0xb8] sm:$0xff]
      %v280 = vld [vmem:[#allocation2 + $0xc0] sm:$0xff]
      %v281 = vld [vmem:[#allocation2 + $0xc8] sm:$0xff]
      %v282 = vld [vmem:[#allocation2 + $0xd0] sm:$0xff]
      %v283 = vld [vmem:[#allocation2 + $0xd8] sm:$0xff]
      %v284 = vld [vmem:[#allocation2 + $0xe0] sm:$0xff]
      %v285 = vld [vmem:[#allocation2 + $0xe8] sm:$0xff]
      %v286 = vld [vmem:[#allocation2 + $0xf0] sm:$0xff]
      %v287 = vld [vmem:[#allocation2 + $0xf8] sm:$0xff]
      %v288 = vld [vmem:[%s205] sm:$0xf]
      %v289 = vld [vmem:[%s205 + $0x4] sm:$0xf]
      %v290 = vld [vmem:[%s205 + $0x8] sm:$0xf]
      %v291 = vld [vmem:[%s205 + $0xc] sm:$0xf]
      %v292 = vld [vmem:[%s205 + $0x10] sm:$0xf]
      %v293 = vld [vmem:[%s205 + $0x14] sm:$0xf]
      %v294 = vld [vmem:[%s205 + $0x18] sm:$0xf]
      %v295 = vld [vmem:[%s205 + $0x1c] sm:$0xf]
      %v296 = vld [vmem:[%s205 + $0x20] sm:$0xf]
      %v297 = vld [vmem:[%s205 + $0x24] sm:$0xf]
      %v298 = vld [vmem:[%s205 + $0x28] sm:$0xf]
      %v299 = vld [vmem:[%s205 + $0x2c] sm:$0xf]
      %v300 = vld [vmem:[%s205 + $0x30] sm:$0xf]
      %v301 = vld [vmem:[%s205 + $0x34] sm:$0xf]
      %v302 = vld [vmem:[%s205 + $0x38] sm:$0xf]
      %v303 = vld [vmem:[%s205 + $0x3c] sm:$0xf]
      %v304 = vld [vmem:[%s205 + $0x40] sm:$0xf]
      %v305 = vld [vmem:[%s205 + $0x44] sm:$0xf]
      %v306 = vld [vmem:[%s205 + $0x48] sm:$0xf]
      %v307 = vld [vmem:[%s205 + $0x4c] sm:$0xf]
      %v308 = vld [vmem:[%s205 + $0x50] sm:$0xf]
      %v309 = vld [vmem:[%s205 + $0x54] sm:$0xf]
      %v310 = vld [vmem:[%s205 + $0x58] sm:$0xf]
      %v311 = vld [vmem:[%s205 + $0x5c] sm:$0xf]
      %v312 = vld [vmem:[%s205 + $0x60] sm:$0xf]
      %v313 = vld [vmem:[%s205 + $0x64] sm:$0xf]
      %v314 = vld [vmem:[%s205 + $0x68] sm:$0xf]
      %v315 = vld [vmem:[%s205 + $0x6c] sm:$0xf]
      %v316 = vld [vmem:[%s205 + $0x70] sm:$0xf]
      %v317 = vld [vmem:[%s205 + $0x74] sm:$0xf]
      %v318 = vld [vmem:[%s205 + $0x78] sm:$0xf]
      %v319 = vld [vmem:[%s205 + $0x7c] sm:$0xf]
      %v320 = vld [vmem:[%s211] sm:$0xf]
      %v321 = vld [vmem:[%s211 + $0x4] sm:$0xf]
      %v322 = vld [vmem:[%s211 + $0x8] sm:$0xf]
      %v323 = vld [vmem:[%s211 + $0xc] sm:$0xf]
      %v324 = vld [vmem:[%s211 + $0x10] sm:$0xf]
      %v325 = vld [vmem:[%s211 + $0x14] sm:$0xf]
      %v326 = vld [vmem:[%s211 + $0x18] sm:$0xf]
      %v327 = vld [vmem:[%s211 + $0x1c] sm:$0xf]
      %v328 = vld [vmem:[%s211 + $0x20] sm:$0xf]
      %v329 = vld [vmem:[%s211 + $0x24] sm:$0xf]
      %v330 = vld [vmem:[%s211 + $0x28] sm:$0xf]
      %v331 = vld [vmem:[%s211 + $0x2c] sm:$0xf]
      %v332 = vld [vmem:[%s211 + $0x30] sm:$0xf]
      %v333 = vld [vmem:[%s211 + $0x34] sm:$0xf]
      %v334 = vld [vmem:[%s211 + $0x38] sm:$0xf]
      %v335 = vld [vmem:[%s211 + $0x3c] sm:$0xf]
      %v368 = vunpack.c.l.b16 %v288
      %v369 = vunpack.c.l.b16 %v289
      %v370 = vunpack.c.l.b16 %v290
      %v371 = vunpack.c.l.b16 %v291
      %v372 = vunpack.c.l.b16 %v292
      %v373 = vunpack.c.l.b16 %v293
      %v374 = vunpack.c.l.b16 %v294
      %v375 = vunpack.c.l.b16 %v295
      %v376 = vunpack.c.l.b16 %v296
      %v377 = vunpack.c.l.b16 %v297
      %v378 = vunpack.c.l.b16 %v298
      %v379 = vunpack.c.l.b16 %v299
      %v380 = vunpack.c.l.b16 %v300
      %v381 = vunpack.c.l.b16 %v301
      %v382 = vunpack.c.l.b16 %v302
      %v383 = vunpack.c.l.b16 %v303
      %v384 = vunpack.c.l.b16 %v304
      %v385 = vunpack.c.l.b16 %v305
      %v386 = vunpack.c.l.b16 %v306
      %v387 = vunpack.c.l.b16 %v307
      %v388 = vunpack.c.l.b16 %v308
      %v389 = vunpack.c.l.b16 %v309
      %v390 = vunpack.c.l.b16 %v310
      %v391 = vunpack.c.l.b16 %v311
      %v392 = vunpack.c.l.b16 %v312
      %v393 = vunpack.c.l.b16 %v313
      %v394 = vunpack.c.l.b16 %v314
      %v395 = vunpack.c.l.b16 %v315
      %v396 = vunpack.c.l.b16 %v316
      %v397 = vunpack.c.l.b16 %v317
      %v398 = vunpack.c.l.b16 %v318
      %v399 = vunpack.c.l.b16 %v319
      %v400 = vpack.c.b16 %v369, %v368
      %v401 = vpack.c.b16 %v371, %v370
      %v402 = vpack.c.b16 %v373, %v372
      %v403 = vpack.c.b16 %v375, %v374
      %v404 = vpack.c.b16 %v377, %v376
      %v405 = vpack.c.b16 %v379, %v378
      %v406 = vpack.c.b16 %v381, %v380
      %v407 = vpack.c.b16 %v383, %v382
      %v408 = vpack.c.b16 %v385, %v384
      %v409 = vpack.c.b16 %v387, %v386
      %v410 = vpack.c.b16 %v389, %v388
      %v411 = vpack.c.b16 %v391, %v390
      %v412 = vpack.c.b16 %v393, %v392
      %v413 = vpack.c.b16 %v395, %v394
      %v414 = vpack.c.b16 %v397, %v396
      %v415 = vpack.c.b16 %v399, %v398
      %v448 = vunpack.c.l.b16 %v320
      %v449 = vunpack.c.l.b16 %v321
      %v450 = vunpack.c.l.b16 %v322
      %v451 = vunpack.c.l.b16 %v323
      %v452 = vunpack.c.l.b16 %v324
      %v453 = vunpack.c.l.b16 %v325
      %v454 = vunpack.c.l.b16 %v326
      %v455 = vunpack.c.l.b16 %v327
      %v456 = vunpack.c.l.b16 %v328
      %v457 = vunpack.c.l.b16 %v329
      %v458 = vunpack.c.l.b16 %v330
      %v459 = vunpack.c.l.b16 %v331
      %v460 = vunpack.c.l.b16 %v332
      %v461 = vunpack.c.l.b16 %v333
      %v462 = vunpack.c.l.b16 %v334
      %v463 = vunpack.c.l.b16 %v335
      %v464 = vpack.c.b16 %v449, %v448
      %v465 = vpack.c.b16 %v451, %v450
      %v466 = vpack.c.b16 %v453, %v452
      %v467 = vpack.c.b16 %v455, %v454
      %v468 = vpack.c.b16 %v457, %v456
      %v469 = vpack.c.b16 %v459, %v458
      %v470 = vpack.c.b16 %v461, %v460
      %v471 = vpack.c.b16 %v463, %v462
      %480 = vmatprep.subr.bf16.mxu0 0
      %481 = vmatpush1.bf16.msra.mxu0 %v464
      %482 = vmatprep.subr.bf16.mxu0 0
      %483 = vmatpush1.bf16.msra.mxu0 %v465
      %484 = vmatprep.subr.bf16.mxu0 0
      %485 = vmatpush1.bf16.msra.mxu0 %v466
      %486 = vmatprep.subr.bf16.mxu0 0
      %487 = vmatpush1.bf16.msra.mxu0 %v467
      %488 = vmatprep.subr.bf16.mxu0 0
      %489 = vmatpush1.bf16.msra.mxu0 %v468
      %490 = vmatprep.subr.bf16.mxu0 0
      %491 = vmatpush1.bf16.msra.mxu0 %v469
      %492 = vmatprep.subr.bf16.mxu0 0
      %493 = vmatpush1.bf16.msra.mxu0 %v470
      %494 = vmatprep.subr.bf16.mxu0 0
      %495 = vmatpush1.bf16.msra.mxu0 %v471
      %496 = vmatprep.subr.bf16.mxu0 0
      %497 = vmatpush1.bf16.msra.mxu0 0
      %498 = vmatprep.subr.bf16.mxu0 0
      %499 = vmatpush1.bf16.msra.mxu0 0
      %500 = vmatprep.subr.bf16.mxu0 0
      %501 = vmatpush1.bf16.msra.mxu0 0
      %502 = vmatprep.subr.bf16.mxu0 0
      %503 = vmatpush1.bf16.msra.mxu0 0
      %504 = vmatprep.subr.bf16.mxu0 0
      %505 = vmatpush1.bf16.msra.mxu0 0
      %506 = vmatprep.subr.bf16.mxu0 0
      %507 = vmatpush1.bf16.msra.mxu0 0
      %508 = vmatprep.subr.bf16.mxu0 0
      %509 = vmatpush1.bf16.msra.mxu0 0
      %510 = vmatprep.subr.bf16.mxu0 0
      %511 = vmatpush1.bf16.msra.mxu0 0
      %512 = vmatprep.mubr.bf16.mxu0 0
      %513 = vmatmul.mubr.bf16.gmra.mrb[0].mxu0 %v400
      %v514 = vpop.f32.mrb[0].mxu0
      %v515 = vadd.f32 0.0, %v514
      %v516 = vpop.f32.mrb[0].mxu0
      %v517 = vpop.f32.mrb[0].mxu0
      %v518 = vadd.f32 0.0, %v517
      %v519 = vpop.f32.mrb[0].mxu0
      %520 = vmatprep.mubr.bf16.mxu0 0
      %521 = vmatmul.mubr.bf16.gmra.mrb[0].mxu0 %v401
      %v522 = vpop.f32.mrb[0].mxu0
      %v523 = vadd.f32 0.0, %v522
      %v524 = vpop.f32.mrb[0].mxu0
      %v525 = vpop.f32.mrb[0].mxu0
      %v526 = vadd.f32 0.0, %v525
      %v527 = vpop.f32.mrb[0].mxu0
      %528 = vmatprep.mubr.bf16.mxu0 0
      %529 = vmatmul.mubr.bf16.gmra.mrb[0].mxu0 %v402
      %v530 = vpop.f32.mrb[0].mxu0
      %v531 = vadd.f32 0.0, %v530
      %v532 = vpop.f32.mrb[0].mxu0
      %v533 = vpop.f32.mrb[0].mxu0
      %v534 = vadd.f32 0.0, %v533
      %v535 = vpop.f32.mrb[0].mxu0
      %536 = vmatprep.mubr.bf16.mxu0 0
      %537 = vmatmul.mubr.bf16.gmra.mrb[0].mxu0 %v403
      %v538 = vpop.f32.mrb[0].mxu0
      %v539 = vadd.f32 0.0, %v538
      %v540 = vpop.f32.mrb[0].mxu0
      %v541 = vpop.f32.mrb[0].mxu0
      %v542 = vadd.f32 0.0, %v541
      %v543 = vpop.f32.mrb[0].mxu0
      %544 = vmatprep.mubr.bf16.mxu0 0
      %545 = vmatmul.mubr.bf16.gmra.mrb[0].mxu0 %v404
      %v546 = vpop.f32.mrb[0].mxu0
      %v547 = vadd.f32 0.0, %v546
      %v548 = vpop.f32.mrb[0].mxu0
      %v549 = vpop.f32.mrb[0].mxu0
      %v550 = vadd.f32 0.0, %v549
      %v551 = vpop.f32.mrb[0].mxu0
      %552 = vmatprep.mubr.bf16.mxu0 0
      %553 = vmatmul.mubr.bf16.gmra.mrb[0].mxu0 %v405
      %v554 = vpop.f32.mrb[0].mxu0
      %v555 = vadd.f32 0.0, %v554
      %v556 = vpop.f32.mrb[0].mxu0
      %v557 = vpop.f32.mrb[0].mxu0
      %v558 = vadd.f32 0.0, %v557
      %v559 = vpop.f32.mrb[0].mxu0
      %560 = vmatprep.mubr.bf16.mxu0 0
      %561 = vmatmul.mubr.bf16.gmra.mrb[0].mxu0 %v406
      %v562 = vpop.f32.mrb[0].mxu0
      %v563 = vadd.f32 0.0, %v562
      %v564 = vpop.f32.mrb[0].mxu0
      %v565 = vpop.f32.mrb[0].mxu0
      %v566 = vadd.f32 0.0, %v565
      %v567 = vpop.f32.mrb[0].mxu0
      %568 = vmatprep.mubr.bf16.mxu0 0
      %569 = vmatmul.mubr.bf16.gmra.mrb[0].mxu0 %v407
      %v570 = vpop.f32.mrb[0].mxu0
      %v571 = vadd.f32 0.0, %v570
      %v572 = vpop.f32.mrb[0].mxu0
      %v573 = vpop.f32.mrb[0].mxu0
      %v574 = vadd.f32 0.0, %v573
      %v575 = vpop.f32.mrb[0].mxu0
      %576 = vmatprep.mubr.bf16.mxu0 0
      %577 = vmatmul.mubr.bf16.gmra.mrb[0].mxu0 %v408
      %v578 = vpop.f32.mrb[0].mxu0
      %v579 = vadd.f32 0.0, %v578
      %v580 = vpop.f32.mrb[0].mxu0
      %v581 = vpop.f32.mrb[0].mxu0
      %v582 = vadd.f32 0.0, %v581
      %v583 = vpop.f32.mrb[0].mxu0
      %584 = vmatprep.mubr.bf16.mxu0 0
      %585 = vmatmul.mubr.bf16.gmra.mrb[0].mxu0 %v409
      %v586 = vpop.f32.mrb[0].mxu0
      %v587 = vadd.f32 0.0, %v586
      %v588 = vpop.f32.mrb[0].mxu0
      %v589 = vpop.f32.mrb[0].mxu0
      %v590 = vadd.f32 0.0, %v589
      %v591 = vpop.f32.mrb[0].mxu0
      %592 = vmatprep.mubr.bf16.mxu0 0
      %593 = vmatmul.mubr.bf16.gmra.mrb[0].mxu0 %v410
      %v594 = vpop.f32.mrb[0].mxu0
      %v595 = vadd.f32 0.0, %v594
      %v596 = vpop.f32.mrb[0].mxu0
      %v597 = vpop.f32.mrb[0].mxu0
      %v598 = vadd.f32 0.0, %v597
      %v599 = vpop.f32.mrb[0].mxu0
      %600 = vmatprep.mubr.bf16.mxu0 0
      %601 = vmatmul.mubr.bf16.gmra.mrb[0].mxu0 %v411
      %v602 = vpop.f32.mrb[0].mxu0
      %v603 = vadd.f32 0.0, %v602
      %v604 = vpop.f32.mrb[0].mxu0
      %v605 = vpop.f32.mrb[0].mxu0
      %v606 = vadd.f32 0.0, %v605
      %v607 = vpop.f32.mrb[0].mxu0
      %608 = vmatprep.mubr.bf16.mxu0 0
      %609 = vmatmul.mubr.bf16.gmra.mrb[0].mxu0 %v412
      %v610 = vpop.f32.mrb[0].mxu0
      %v611 = vadd.f32 0.0, %v610
      %v612 = vpop.f32.mrb[0].mxu0
      %v613 = vpop.f32.mrb[0].mxu0
      %v614 = vadd.f32 0.0, %v613
      %v615 = vpop.f32.mrb[0].mxu0
      %616 = vmatprep.mubr.bf16.mxu0 0
      %617 = vmatmul.mubr.bf16.gmra.mrb[0].mxu0 %v413
      %v618 = vpop.f32.mrb[0].mxu0
      %v619 = vadd.f32 0.0, %v618
      %v620 = vpop.f32.mrb[0].mxu0
      %v621 = vpop.f32.mrb[0].mxu0
      %v622 = vadd.f32 0.0, %v621
      %v623 = vpop.f32.mrb[0].mxu0
      %624 = vmatprep.mubr.bf16.mxu0 0
      %625 = vmatmul.mubr.bf16.gmra.mrb[0].mxu0 %v414
      %v626 = vpop.f32.mrb[0].mxu0
      %v627 = vadd.f32 0.0, %v626
      %v628 = vpop.f32.mrb[0].mxu0
      %v629 = vpop.f32.mrb[0].mxu0
      %v630 = vadd.f32 0.0, %v629
      %v631 = vpop.f32.mrb[0].mxu0
      %632 = vmatprep.mubr.bf16.mxu0 0
      %633 = vmatmul.mubr.bf16.gmra.mrb[0].mxu0 %v415
      %v634 = vpop.f32.mrb[0].mxu0
      %v635 = vadd.f32 0.0, %v634
      %v636 = vpop.f32.mrb[0].mxu0
      %v637 = vpop.f32.mrb[0].mxu0
      %v638 = vadd.f32 0.0, %v637
      %v639 = vpop.f32.mrb[0].mxu0
      %640 = vdwg.mxu0
      %v641 = vadd.f32 %v256, %v515
      %v642 = vadd.f32 %v257, %v518
      %v643 = vadd.f32 %v258, %v523
      %v644 = vadd.f32 %v259, %v526
      %v645 = vadd.f32 %v260, %v531
      %v646 = vadd.f32 %v261, %v534
      %v647 = vadd.f32 %v262, %v539
      %v648 = vadd.f32 %v263, %v542
      %v649 = vadd.f32 %v264, %v547
      %v650 = vadd.f32 %v265, %v550
      %v651 = vadd.f32 %v266, %v555
      %v652 = vadd.f32 %v267, %v558
      %v653 = vadd.f32 %v268, %v563
      %v654 = vadd.f32 %v269, %v566
      %v655 = vadd.f32 %v270, %v571
      %v656 = vadd.f32 %v271, %v574
      %v657 = vadd.f32 %v272, %v579
      %v658 = vadd.f32 %v273, %v582
      %v659 = vadd.f32 %v274, %v587
      %v660 = vadd.f32 %v275, %v590
      %v661 = vadd.f32 %v276, %v595
      %v662 = vadd.f32 %v277, %v598
      %v663 = vadd.f32 %v278, %v603
      %v664 = vadd.f32 %v279, %v606
      %v665 = vadd.f32 %v280, %v611
      %v666 = vadd.f32 %v281, %v614
      %v667 = vadd.f32 %v282, %v619
      %v668 = vadd.f32 %v283, %v622
      %v669 = vadd.f32 %v284, %v627
      %v670 = vadd.f32 %v285, %v630
      %v671 = vadd.f32 %v286, %v635
      %v672 = vadd.f32 %v287, %v638
      %673 = vst [vmem:[#allocation2] sm:$0xff] %v641
      %674 = vst [vmem:[#allocation2 + $0x8] sm:$0xff] %v642
      %675 = vst [vmem:[#allocation2 + $0x10] sm:$0xff] %v643
      %676 = vst [vmem:[#allocation2 + $0x18] sm:$0xff] %v644
      %677 = vst [vmem:[#allocation2 + $0x20] sm:$0xff] %v645
      %678 = vst [vmem:[#allocation2 + $0x28] sm:$0xff] %v646
      %679 = vst [vmem:[#allocation2 + $0x30] sm:$0xff] %v647
      %680 = vst [vmem:[#allocation2 + $0x38] sm:$0xff] %v648
      %681 = vst [vmem:[#allocation2 + $0x40] sm:$0xff] %v649
      %682 = vst [vmem:[#allocation2 + $0x48] sm:$0xff] %v650
      %683 = vst [vmem:[#allocation2 + $0x50] sm:$0xff] %v651
      %684 = vst [vmem:[#allocation2 + $0x58] sm:$0xff] %v652
      %685 = vst [vmem:[#allocation2 + $0x60] sm:$0xff] %v653
      %686 = vst [vmem:[#allocation2 + $0x68] sm:$0xff] %v654
      %687 = vst [vmem:[#allocation2 + $0x70] sm:$0xff] %v655
      %688 = vst [vmem:[#allocation2 + $0x78] sm:$0xff] %v656
      %689 = vst [vmem:[#allocation2 + $0x80] sm:$0xff] %v657
      %690 = vst [vmem:[#allocation2 + $0x88] sm:$0xff] %v658
      %691 = vst [vmem:[#allocation2 + $0x90] sm:$0xff] %v659
      %692 = vst [vmem:[#allocation2 + $0x98] sm:$0xff] %v660
      %693 = vst [vmem:[#allocation2 + $0xa0] sm:$0xff] %v661
      %694 = vst [vmem:[#allocation2 + $0xa8] sm:$0xff] %v662
      %695 = vst [vmem:[#allocation2 + $0xb0] sm:$0xff] %v663
      %696 = vst [vmem:[#allocation2 + $0xb8] sm:$0xff] %v664
      %697 = vst [vmem:[#allocation2 + $0xc0] sm:$0xff] %v665
      %698 = vst [vmem:[#allocation2 + $0xc8] sm:$0xff] %v666
      %699 = vst [vmem:[#allocation2 + $0xd0] sm:$0xff] %v667
      %700 = vst [vmem:[#allocation2 + $0xd8] sm:$0xff] %v668
      %701 = vst [vmem:[#allocation2 + $0xe0] sm:$0xff] %v669
      %702 = vst [vmem:[#allocation2 + $0xe8] sm:$0xff] %v670
      %703 = vst [vmem:[#allocation2 + $0xf0] sm:$0xff] %v671
      %704 = vst [vmem:[#allocation2 + $0xf8] sm:$0xff] %v672
      // Predicated region
      $region37: #{_lambda_.5} parent=31 // pred_check
        %p705 = pneg %p220
      $region38: #{_lambda_.5} parent=31 // pred_check_branch
        %707 = sbr.rel (%p705) target = $region40
      $region39: #{_lambda_.5} parent=31 // pred_region
        %v708 = vld [vmem:[#allocation2] sm:$0xff]
        %v709 = vld [vmem:[#allocation2 + $0x8] sm:$0xff]
        %v710 = vld [vmem:[#allocation2 + $0x10] sm:$0xff]
        %v711 = vld [vmem:[#allocation2 + $0x18] sm:$0xff]
        %v712 = vld [vmem:[#allocation2 + $0x20] sm:$0xff]
        %v713 = vld [vmem:[#allocation2 + $0x28] sm:$0xff]
        %v714 = vld [vmem:[#allocation2 + $0x30] sm:$0xff]
        %v715 = vld [vmem:[#allocation2 + $0x38] sm:$0xff]
        %v716 = vld [vmem:[#allocation2 + $0x40] sm:$0xff]
        %v717 = vld [vmem:[#allocation2 + $0x48] sm:$0xff]
        %v718 = vld [vmem:[#allocation2 + $0x50] sm:$0xff]
        %v719 = vld [vmem:[#allocation2 + $0x58] sm:$0xff]
        %v720 = vld [vmem:[#allocation2 + $0x60] sm:$0xff]
        %v721 = vld [vmem:[#allocation2 + $0x68] sm:$0xff]
        %v722 = vld [vmem:[#allocation2 + $0x70] sm:$0xff]
        %v723 = vld [vmem:[#allocation2 + $0x78] sm:$0xff]
        %v724 = vld [vmem:[#allocation2 + $0x80] sm:$0xff]
        %v725 = vld [vmem:[#allocation2 + $0x88] sm:$0xff]
        %v726 = vld [vmem:[#allocation2 + $0x90] sm:$0xff]
        %v727 = vld [vmem:[#allocation2 + $0x98] sm:$0xff]
        %v728 = vld [vmem:[#allocation2 + $0xa0] sm:$0xff]
        %v729 = vld [vmem:[#allocation2 + $0xa8] sm:$0xff]
        %v730 = vld [vmem:[#allocation2 + $0xb0] sm:$0xff]
        %v731 = vld [vmem:[#allocation2 + $0xb8] sm:$0xff]
        %v732 = vld [vmem:[#allocation2 + $0xc0] sm:$0xff]
        %v733 = vld [vmem:[#allocation2 + $0xc8] sm:$0xff]
        %v734 = vld [vmem:[#allocation2 + $0xd0] sm:$0xff]
        %v735 = vld [vmem:[#allocation2 + $0xd8] sm:$0xff]
        %v736 = vld [vmem:[#allocation2 + $0xe0] sm:$0xff]
        %v737 = vld [vmem:[#allocation2 + $0xe8] sm:$0xff]
        %v738 = vld [vmem:[#allocation2 + $0xf0] sm:$0xff]
        %v739 = vld [vmem:[#allocation2 + $0xf8] sm:$0xff]
        %v740 = vld [vmem:[%s2] sm:$0x1]
        %v742 = vlaneseq
        %v743 = vshrl.u32 %v742, 7
        %v744 = vsub.s32 0, %v743
        %v745 = vrot.slane %v740, %v744
        %v747 = vadd.f32 %v708, %v745
        %v748 = vadd.f32 %v709, %v745
        %v749 = vadd.f32 %v710, %v745
        %v750 = vadd.f32 %v711, %v745
        %v751 = vadd.f32 %v712, %v745
        %v752 = vadd.f32 %v713, %v745
        %v753 = vadd.f32 %v714, %v745
        %v754 = vadd.f32 %v715, %v745
        %v755 = vadd.f32 %v716, %v745
        %v756 = vadd.f32 %v717, %v745
        %v757 = vadd.f32 %v718, %v745
        %v758 = vadd.f32 %v719, %v745
        %v759 = vadd.f32 %v720, %v745
        %v760 = vadd.f32 %v721, %v745
        %v761 = vadd.f32 %v722, %v745
        %v762 = vadd.f32 %v723, %v745
        %v763 = vadd.f32 %v724, %v745
        %v764 = vadd.f32 %v725, %v745
        %v765 = vadd.f32 %v726, %v745
        %v766 = vadd.f32 %v727, %v745
        %v767 = vadd.f32 %v728, %v745
        %v768 = vadd.f32 %v729, %v745
        %v769 = vadd.f32 %v730, %v745
        %v770 = vadd.f32 %v731, %v745
        %v771 = vadd.f32 %v732, %v745
        %v772 = vadd.f32 %v733, %v745
        %v773 = vadd.f32 %v734, %v745
        %v774 = vadd.f32 %v735, %v745
        %v775 = vadd.f32 %v736, %v745
        %v776 = vadd.f32 %v737, %v745
        %v777 = vadd.f32 %v738, %v745
        %v778 = vadd.f32 %v739, %v745
        %vm779 = vcmp.ge.f32.partialorder %v747, 0.0
        %vm780 = vcmp.ge.f32.partialorder %v748, 0.0
        %vm781 = vcmp.ge.f32.partialorder %v749, 0.0
        %vm782 = vcmp.ge.f32.partialorder %v750, 0.0
        %vm783 = vcmp.ge.f32.partialorder %v751, 0.0
        %vm784 = vcmp.ge.f32.partialorder %v752, 0.0
        %vm785 = vcmp.ge.f32.partialorder %v753, 0.0
        %vm786 = vcmp.ge.f32.partialorder %v754, 0.0
        %vm787 = vcmp.ge.f32.partialorder %v755, 0.0
        %vm788 = vcmp.ge.f32.partialorder %v756, 0.0
        %vm789 = vcmp.ge.f32.partialorder %v757, 0.0
        %vm790 = vcmp.ge.f32.partialorder %v758, 0.0
        %vm791 = vcmp.ge.f32.partialorder %v759, 0.0
        %vm792 = vcmp.ge.f32.partialorder %v760, 0.0
        %vm793 = vcmp.ge.f32.partialorder %v761, 0.0
        %vm794 = vcmp.ge.f32.partialorder %v762, 0.0
        %vm795 = vcmp.ge.f32.partialorder %v763, 0.0
        %vm796 = vcmp.ge.f32.partialorder %v764, 0.0
        %vm797 = vcmp.ge.f32.partialorder %v765, 0.0
        %vm798 = vcmp.ge.f32.partialorder %v766, 0.0
        %vm799 = vcmp.ge.f32.partialorder %v767, 0.0
        %vm800 = vcmp.ge.f32.partialorder %v768, 0.0
        %vm801 = vcmp.ge.f32.partialorder %v769, 0.0
        %vm802 = vcmp.ge.f32.partialorder %v770, 0.0
        %vm803 = vcmp.ge.f32.partialorder %v771, 0.0
        %vm804 = vcmp.ge.f32.partialorder %v772, 0.0
        %vm805 = vcmp.ge.f32.partialorder %v773, 0.0
        %vm806 = vcmp.ge.f32.partialorder %v774, 0.0
        %vm807 = vcmp.ge.f32.partialorder %v775, 0.0
        %vm808 = vcmp.ge.f32.partialorder %v776, 0.0
        %vm809 = vcmp.ge.f32.partialorder %v777, 0.0
        %vm810 = vcmp.ge.f32.partialorder %v778, 0.0
        %v811 = vmul.f32 %v747, 0.2
        %v812 = vmul.f32 %v748, 0.2
        %v813 = vmul.f32 %v749, 0.2
        %v814 = vmul.f32 %v750, 0.2
        %v815 = vmul.f32 %v751, 0.2
        %v816 = vmul.f32 %v752, 0.2
        %v817 = vmul.f32 %v753, 0.2
        %v818 = vmul.f32 %v754, 0.2
        %v819 = vmul.f32 %v755, 0.2
        %v820 = vmul.f32 %v756, 0.2
        %v821 = vmul.f32 %v757, 0.2
        %v822 = vmul.f32 %v758, 0.2
        %v823 = vmul.f32 %v759, 0.2
        %v824 = vmul.f32 %v760, 0.2
        %v825 = vmul.f32 %v761, 0.2
        %v826 = vmul.f32 %v762, 0.2
        %v827 = vmul.f32 %v763, 0.2
        %v828 = vmul.f32 %v764, 0.2
        %v829 = vmul.f32 %v765, 0.2
        %v830 = vmul.f32 %v766, 0.2
        %v831 = vmul.f32 %v767, 0.2
        %v832 = vmul.f32 %v768, 0.2
        %v833 = vmul.f32 %v769, 0.2
        %v834 = vmul.f32 %v770, 0.2
        %v835 = vmul.f32 %v771, 0.2
        %v836 = vmul.f32 %v772, 0.2
        %v837 = vmul.f32 %v773, 0.2
        %v838 = vmul.f32 %v774, 0.2
        %v839 = vmul.f32 %v775, 0.2
        %v840 = vmul.f32 %v776, 0.2
        %v841 = vmul.f32 %v777, 0.2
        %v842 = vmul.f32 %v778, 0.2
        %v843 = vsel %vm779, %v747, %v811
        %v844 = vsel %vm780, %v748, %v812
        %v845 = vsel %vm781, %v749, %v813
        %v846 = vsel %vm782, %v750, %v814
        %v847 = vsel %vm783, %v751, %v815
        %v848 = vsel %vm784, %v752, %v816
        %v849 = vsel %vm785, %v753, %v817
        %v850 = vsel %vm786, %v754, %v818
        %v851 = vsel %vm787, %v755, %v819
        %v852 = vsel %vm788, %v756, %v820
        %v853 = vsel %vm789, %v757, %v821
        %v854 = vsel %vm790, %v758, %v822
        %v855 = vsel %vm791, %v759, %v823
        %v856 = vsel %vm792, %v760, %v824
        %v857 = vsel %vm793, %v761, %v825
        %v858 = vsel %vm794, %v762, %v826
        %v859 = vsel %vm795, %v763, %v827
        %v860 = vsel %vm796, %v764, %v828
        %v861 = vsel %vm797, %v765, %v829
        %v862 = vsel %vm798, %v766, %v830
        %v863 = vsel %vm799, %v767, %v831
        %v864 = vsel %vm800, %v768, %v832
        %v865 = vsel %vm801, %v769, %v833
        %v866 = vsel %vm802, %v770, %v834
        %v867 = vsel %vm803, %v771, %v835
        %v868 = vsel %vm804, %v772, %v836
        %v869 = vsel %vm805, %v773, %v837
        %v870 = vsel %vm806, %v774, %v838
        %v871 = vsel %vm807, %v775, %v839
        %v872 = vsel %vm808, %v776, %v840
        %v873 = vsel %vm809, %v777, %v841
        %v874 = vsel %vm810, %v778, %v842
        %875 = vst [vmem:[%s217] sm:$0xff] %v843
        %876 = vst [vmem:[%s217 + $0x8] sm:$0xff] %v844
        %877 = vst [vmem:[%s217 + $0x10] sm:$0xff] %v845
        %878 = vst [vmem:[%s217 + $0x18] sm:$0xff] %v846
        %879 = vst [vmem:[%s217 + $0x20] sm:$0xff] %v847
        %880 = vst [vmem:[%s217 + $0x28] sm:$0xff] %v848
        %881 = vst [vmem:[%s217 + $0x30] sm:$0xff] %v849
        %882 = vst [vmem:[%s217 + $0x38] sm:$0xff] %v850
        %883 = vst [vmem:[%s217 + $0x40] sm:$0xff] %v851
        %884 = vst [vmem:[%s217 + $0x48] sm:$0xff] %v852
        %885 = vst [vmem:[%s217 + $0x50] sm:$0xff] %v853
        %886 = vst [vmem:[%s217 + $0x58] sm:$0xff] %v854
        %887 = vst [vmem:[%s217 + $0x60] sm:$0xff] %v855
        %888 = vst [vmem:[%s217 + $0x68] sm:$0xff] %v856
        %889 = vst [vmem:[%s217 + $0x70] sm:$0xff] %v857
        %890 = vst [vmem:[%s217 + $0x78] sm:$0xff] %v858
        %891 = vst [vmem:[%s217 + $0x80] sm:$0xff] %v859
        %892 = vst [vmem:[%s217 + $0x88] sm:$0xff] %v860
        %893 = vst [vmem:[%s217 + $0x90] sm:$0xff] %v861
        %894 = vst [vmem:[%s217 + $0x98] sm:$0xff] %v862
        %895 = vst [vmem:[%s217 + $0xa0] sm:$0xff] %v863
        %896 = vst [vmem:[%s217 + $0xa8] sm:$0xff] %v864
        %897 = vst [vmem:[%s217 + $0xb0] sm:$0xff] %v865
        %898 = vst [vmem:[%s217 + $0xb8] sm:$0xff] %v866
        %899 = vst [vmem:[%s217 + $0xc0] sm:$0xff] %v867
        %900 = vst [vmem:[%s217 + $0xc8] sm:$0xff] %v868
        %901 = vst [vmem:[%s217 + $0xd0] sm:$0xff] %v869
        %902 = vst [vmem:[%s217 + $0xd8] sm:$0xff] %v870
        %903 = vst [vmem:[%s217 + $0xe0] sm:$0xff] %v871
        %904 = vst [vmem:[%s217 + $0xe8] sm:$0xff] %v872
        %905 = vst [vmem:[%s217 + $0xf0] sm:$0xff] %v873
        %906 = vst [vmem:[%s217 + $0xf8] sm:$0xff] %v874
      $region40: #{_lambda_.5} parent=31 // pred_fallthru
        _
      %s907 = smul.u32 32, %s18
      %p908 = scmp.lt.s32.totalorder %s907, 63
      %s909 = scalar_select %p908, %s907, 63
      %s910 = smul.addr %s909, 8
      %s911 = scalar_lea.vmem %s3, %s910
      // Predicated region
      $region41: #{_lambda_.5} parent=31 // pred_check
        %p912 = pneg %p119
      $region42: #{_lambda_.5} parent=31 // pred_check_branch
        %914 = sbr.rel (%p912) target = $region44
      $region43: #{_lambda_.5} parent=31 // pred_region
        %s915 = smul.u32 32, %s18
      $region44: #{_lambda_.5} parent=31 // pred_fallthru
        _
    $region32: #{_lambda_.5} parent=5 // pred_fallthru
      _
    %p916 = scmp.le.s32.totalorder 2, %s9
    // Predicated region
    $region45: #{_lambda_.5} parent=5 // pred_check
      %p917 = pneg %p916
    $region46: #{_lambda_.5} parent=5 // pred_check_branch
      %919 = sbr.rel (%p917) target = $region48
    $region47: #{_lambda_.5} parent=5 // pred_region
      %s920 = ssub.s32 %s9, 2
      // Predicated region
      $region49: #{_lambda_.5} parent=47 // pred_check
        %p921 = pneg %p125
      $region50: #{_lambda_.5} parent=47 // pred_check_branch
        %923 = sbr.rel (%p921) target = $region52
      $region51: #{_lambda_.5} parent=47 // pred_region
        %s924 = smul.u32 32, %s20
        %p925 = scmp.lt.s32.totalorder %s924, 63
        %s926 = scalar_select %p925, %s924, 63
        %s927 = smul.addr %s926, 8
        %s928 = scalar_lea.vmem %s3, %s927
      $region52: #{_lambda_.5} parent=47 // pred_fallthru
        _
    $region48: #{_lambda_.5} parent=5 // pred_fallthru
      _
  $region6: #{_lambda_.5} parent=0 // loop_footer
    %s13 = sadd.s32 1, %s9
  $region7: #{_lambda_.5} parent=0 // loop_footer_branch
    %8 = sbr.rel target = $region3
  $region8: #{_lambda_.5} parent=0 // loop_exit
    _

// kernel: _lambda_.6
$region0: #{_lambda_.6}
  #allocation0 [shape = 'u32[]', space=smem, size = 0x4, offset = 0x4, fixed_abs, tag = 'smem constant byte address 0x4 - core index']
  #allocation1 [shape = 'u32[144,128]{1,0:T(1,128)}', space=vmem, size = 0x12000, scoped, tag = 'internal scratch']
  #allocation2 [shape = 'f32[128,128]{1,0:T(8,128)}', space=vmem, size = 0x10000, scoped, tag = 'scratch operand']
  %s0 = inlined_call_operand.vmem [shape: bf16[128,128], index: 0, kind: input, shape index: {}]
  %s1 = inlined_call_operand.vmem [shape: bf16[128,128], index: 1, kind: input, shape index: {}]
  %s2 = inlined_call_operand.vmem [shape: f32[1,128], index: 2, kind: input, shape index: {}]
  %s3 = inlined_call_operand.vmem [shape: f32[128,128], index: 3, kind: output, shape index: {}]
  %s4 = sld [smem:[#allocation0]]
  $region30: #{_lambda_.6} parent=0
    _
  %s6 = ssub.s32 1, %s4
  %s7 = scalar_select 0, %s6, %s4
  // Predicated region
  $region2: #{_lambda_.6} parent=0 // pred_check
    _
  $region3: #{_lambda_.6} parent=0 // pred_check_branch
    %9 = sbr.rel (0) target = $region5
  $region4: #{_lambda_.6} parent=0 // pred_region
    _
  $region5: #{_lambda_.6} parent=0 // pred_fallthru
    _
  // Predicated region
  $region6: #{_lambda_.6} parent=0 // pred_check
    _
  $region7: #{_lambda_.6} parent=0 // pred_check_branch
    %11 = sbr.rel (0) target = $region9
  $region8: #{_lambda_.6} parent=0 // pred_region
    _
  $region9: #{_lambda_.6} parent=0 // pred_fallthru
    _
  // Predicated region
  $region10: #{_lambda_.6} parent=0 // pred_check
    _
  $region11: #{_lambda_.6} parent=0 // pred_check_branch
    %13 = sbr.rel (0) target = $region13
  $region12: #{_lambda_.6} parent=0 // pred_region
    _
  $region13: #{_lambda_.6} parent=0 // pred_fallthru
    _
  %p15 = scmp.eq.s32.totalorder 0, 0
  // Predicated region
  $region14: #{_lambda_.6} parent=0 // pred_check
    %p16 = pneg %p15
  $region15: #{_lambda_.6} parent=0 // pred_check_branch
    %18 = sbr.rel (%p16) target = $region17
  $region16: #{_lambda_.6} parent=0 // pred_region
    %19 = vst [vmem:[#allocation2] sm:$0xff] 0.0
    %20 = vst [vmem:[#allocation2 + $0x8] sm:$0xff] 0.0
    %21 = vst [vmem:[#allocation2 + $0x10] sm:$0xff] 0.0
    %22 = vst [vmem:[#allocation2 + $0x18] sm:$0xff] 0.0
    %23 = vst [vmem:[#allocation2 + $0x20] sm:$0xff] 0.0
    %24 = vst [vmem:[#allocation2 + $0x28] sm:$0xff] 0.0
    %25 = vst [vmem:[#allocation2 + $0x30] sm:$0xff] 0.0
    %26 = vst [vmem:[#allocation2 + $0x38] sm:$0xff] 0.0
    %27 = vst [vmem:[#allocation2 + $0x40] sm:$0xff] 0.0
    %28 = vst [vmem:[#allocation2 + $0x48] sm:$0xff] 0.0
    %29 = vst [vmem:[#allocation2 + $0x50] sm:$0xff] 0.0
    %30 = vst [vmem:[#allocation2 + $0x58] sm:$0xff] 0.0
    %31 = vst [vmem:[#allocation2 + $0x60] sm:$0xff] 0.0
    %32 = vst [vmem:[#allocation2 + $0x68] sm:$0xff] 0.0
    %33 = vst [vmem:[#allocation2 + $0x70] sm:$0xff] 0.0
    %34 = vst [vmem:[#allocation2 + $0x78] sm:$0xff] 0.0
  $region17: #{_lambda_.6} parent=0 // pred_fallthru
    _
  %v35 = vld [vmem:[#allocation2] sm:$0xff]
  %v36 = vld [vmem:[#allocation2 + $0x8] sm:$0xff]
  %v37 = vld [vmem:[#allocation2 + $0x10] sm:$0xff]
  %v38 = vld [vmem:[#allocation2 + $0x18] sm:$0xff]
  %v39 = vld [vmem:[#allocation2 + $0x20] sm:$0xff]
  %v40 = vld [vmem:[#allocation2 + $0x28] sm:$0xff]
  %v41 = vld [vmem:[#allocation2 + $0x30] sm:$0xff]
  %v42 = vld [vmem:[#allocation2 + $0x38] sm:$0xff]
  %v43 = vld [vmem:[#allocation2 + $0x40] sm:$0xff]
  %v44 = vld [vmem:[#allocation2 + $0x48] sm:$0xff]
  %v45 = vld [vmem:[#allocation2 + $0x50] sm:$0xff]
  %v46 = vld [vmem:[#allocation2 + $0x58] sm:$0xff]
  %v47 = vld [vmem:[#allocation2 + $0x60] sm:$0xff]
  %v48 = vld [vmem:[#allocation2 + $0x68] sm:$0xff]
  %v49 = vld [vmem:[#allocation2 + $0x70] sm:$0xff]
  %v50 = vld [vmem:[#allocation2 + $0x78] sm:$0xff]
  %v51 = vld [vmem:[%s0] sm:$0xf]
  %v52 = vld [vmem:[%s0 + $0x4] sm:$0xf]
  %v53 = vld [vmem:[%s0 + $0x8] sm:$0xf]
  %v54 = vld [vmem:[%s0 + $0xc] sm:$0xf]
  %v55 = vld [vmem:[%s0 + $0x10] sm:$0xf]
  %v56 = vld [vmem:[%s0 + $0x14] sm:$0xf]
  %v57 = vld [vmem:[%s0 + $0x18] sm:$0xf]
  %v58 = vld [vmem:[%s0 + $0x1c] sm:$0xf]
  %v59 = vld [vmem:[%s0 + $0x20] sm:$0xf]
  %v60 = vld [vmem:[%s0 + $0x24] sm:$0xf]
  %v61 = vld [vmem:[%s0 + $0x28] sm:$0xf]
  %v62 = vld [vmem:[%s0 + $0x2c] sm:$0xf]
  %v63 = vld [vmem:[%s0 + $0x30] sm:$0xf]
  %v64 = vld [vmem:[%s0 + $0x34] sm:$0xf]
  %v65 = vld [vmem:[%s0 + $0x38] sm:$0xf]
  %v66 = vld [vmem:[%s0 + $0x3c] sm:$0xf]
  %v67 = vld [vmem:[%s1] sm:$0xf]
  %v68 = vld [vmem:[%s1 + $0x4] sm:$0xf]
  %v69 = vld [vmem:[%s1 + $0x8] sm:$0xf]
  %v70 = vld [vmem:[%s1 + $0xc] sm:$0xf]
  %v71 = vld [vmem:[%s1 + $0x10] sm:$0xf]
  %v72 = vld [vmem:[%s1 + $0x14] sm:$0xf]
  %v73 = vld [vmem:[%s1 + $0x18] sm:$0xf]
  %v74 = vld [vmem:[%s1 + $0x1c] sm:$0xf]
  %v75 = vld [vmem:[%s1 + $0x20] sm:$0xf]
  %v76 = vld [vmem:[%s1 + $0x24] sm:$0xf]
  %v77 = vld [vmem:[%s1 + $0x28] sm:$0xf]
  %v78 = vld [vmem:[%s1 + $0x2c] sm:$0xf]
  %v79 = vld [vmem:[%s1 + $0x30] sm:$0xf]
  %v80 = vld [vmem:[%s1 + $0x34] sm:$0xf]
  %v81 = vld [vmem:[%s1 + $0x38] sm:$0xf]
  %v82 = vld [vmem:[%s1 + $0x3c] sm:$0xf]
  %v99 = vunpack.c.l.b16 %v51
  %v100 = vunpack.c.l.b16 %v52
  %v101 = vunpack.c.l.b16 %v53
  %v102 = vunpack.c.l.b16 %v54
  %v103 = vunpack.c.l.b16 %v55
  %v104 = vunpack.c.l.b16 %v56
  %v105 = vunpack.c.l.b16 %v57
  %v106 = vunpack.c.l.b16 %v58
  %v107 = vunpack.c.l.b16 %v59
  %v108 = vunpack.c.l.b16 %v60
  %v109 = vunpack.c.l.b16 %v61
  %v110 = vunpack.c.l.b16 %v62
  %v111 = vunpack.c.l.b16 %v63
  %v112 = vunpack.c.l.b16 %v64
  %v113 = vunpack.c.l.b16 %v65
  %v114 = vunpack.c.l.b16 %v66
  %v115 = vpack.c.b16 %v100, %v99
  %v116 = vpack.c.b16 %v102, %v101
  %v117 = vpack.c.b16 %v104, %v103
  %v118 = vpack.c.b16 %v106, %v105
  %v119 = vpack.c.b16 %v108, %v107
  %v120 = vpack.c.b16 %v110, %v109
  %v121 = vpack.c.b16 %v112, %v111
  %v122 = vpack.c.b16 %v114, %v113
  %v147 = vunpack.c.l.b16 %v67
  %v148 = vunpack.c.l.b16 %v68
  %v149 = vunpack.c.l.b16 %v69
  %v150 = vunpack.c.l.b16 %v70
  %v151 = vunpack.c.l.b16 %v71
  %v152 = vunpack.c.l.b16 %v72
  %v153 = vunpack.c.l.b16 %v73
  %v154 = vunpack.c.l.b16 %v74
  %v155 = vunpack.c.l.b16 %v75
  %v156 = vunpack.c.l.b16 %v76
  %v157 = vunpack.c.l.b16 %v77
  %v158 = vunpack.c.l.b16 %v78
  %v159 = vunpack.c.l.b16 %v79
  %v160 = vunpack.c.l.b16 %v80
  %v161 = vunpack.c.l.b16 %v81
  %v162 = vunpack.c.l.b16 %v82
  %v163 = vpack.c.b16 %v148, %v147
  %v164 = vpack.c.b16 %v150, %v149
  %v165 = vpack.c.b16 %v152, %v151
  %v166 = vpack.c.b16 %v154, %v153
  %v167 = vpack.c.b16 %v156, %v155
  %v168 = vpack.c.b16 %v158, %v157
  %v169 = vpack.c.b16 %v160, %v159
  %v170 = vpack.c.b16 %v162, %v161
  %179 = vmatprep.subr.bf16.mxu0 0
  %180 = vmatpush1.bf16.msra.mxu0 %v163
  %181 = vmatprep.subr.bf16.mxu0 0
  %182 = vmatpush1.bf16.msra.mxu0 %v164
  %183 = vmatprep.subr.bf16.mxu0 0
  %184 = vmatpush1.bf16.msra.mxu0 %v165
  %185 = vmatprep.subr.bf16.mxu0 0
  %186 = vmatpush1.bf16.msra.mxu0 %v166
  %187 = vmatprep.subr.bf16.mxu0 0
  %188 = vmatpush1.bf16.msra.mxu0 %v167
  %189 = vmatprep.subr.bf16.mxu0 0
  %190 = vmatpush1.bf16.msra.mxu0 %v168
  %191 = vmatprep.subr.bf16.mxu0 0
  %192 = vmatpush1.bf16.msra.mxu0 %v169
  %193 = vmatprep.subr.bf16.mxu0 0
  %194 = vmatpush1.bf16.msra.mxu0 %v170
  %195 = vmatprep.subr.bf16.mxu0 0
  %196 = vmatpush1.bf16.msra.mxu0 0
  %197 = vmatprep.subr.bf16.mxu0 0
  %198 = vmatpush1.bf16.msra.mxu0 0
  %199 = vmatprep.subr.bf16.mxu0 0
  %200 = vmatpush1.bf16.msra.mxu0 0
  %201 = vmatprep.subr.bf16.mxu0 0
  %202 = vmatpush1.bf16.msra.mxu0 0
  %203 = vmatprep.subr.bf16.mxu0 0
  %204 = vmatpush1.bf16.msra.mxu0 0
  %205 = vmatprep.subr.bf16.mxu0 0
  %206 = vmatpush1.bf16.msra.mxu0 0
  %207 = vmatprep.subr.bf16.mxu0 0
  %208 = vmatpush1.bf16.msra.mxu0 0
  %209 = vmatprep.subr.bf16.mxu0 0
  %210 = vmatpush1.bf16.msra.mxu0 0
  %211 = vmatprep.mubr.bf16.mxu0 0
  %212 = vmatmul.mubr.bf16.gmra.mrb[0].mxu0 %v115
  %v213 = vpop.f32.mrb[0].mxu0
  %v214 = vadd.f32 0.0, %v213
  %v215 = vpop.f32.mrb[0].mxu0
  %v216 = vpop.f32.mrb[0].mxu0
  %v217 = vadd.f32 0.0, %v216
  %v218 = vpop.f32.mrb[0].mxu0
  %219 = vmatprep.mubr.bf16.mxu0 0
  %220 = vmatmul.mubr.bf16.gmra.mrb[0].mxu0 %v116
  %v221 = vpop.f32.mrb[0].mxu0
  %v222 = vadd.f32 0.0, %v221
  %v223 = vpop.f32.mrb[0].mxu0
  %v224 = vpop.f32.mrb[0].mxu0
  %v225 = vadd.f32 0.0, %v224
  %v226 = vpop.f32.mrb[0].mxu0
  %227 = vmatprep.mubr.bf16.mxu0 0
  %228 = vmatmul.mubr.bf16.gmra.mrb[0].mxu0 %v117
  %v229 = vpop.f32.mrb[0].mxu0
  %v230 = vadd.f32 0.0, %v229
  %v231 = vpop.f32.mrb[0].mxu0
  %v232 = vpop.f32.mrb[0].mxu0
  %v233 = vadd.f32 0.0, %v232
  %v234 = vpop.f32.mrb[0].mxu0
  %235 = vmatprep.mubr.bf16.mxu0 0
  %236 = vmatmul.mubr.bf16.gmra.mrb[0].mxu0 %v118
  %v237 = vpop.f32.mrb[0].mxu0
  %v238 = vadd.f32 0.0, %v237
  %v239 = vpop.f32.mrb[0].mxu0
  %v240 = vpop.f32.mrb[0].mxu0
  %v241 = vadd.f32 0.0, %v240
  %v242 = vpop.f32.mrb[0].mxu0
  %243 = vmatprep.mubr.bf16.mxu0 0
  %244 = vmatmul.mubr.bf16.gmra.mrb[0].mxu0 %v119
  %v245 = vpop.f32.mrb[0].mxu0
  %v246 = vadd.f32 0.0, %v245
  %v247 = vpop.f32.mrb[0].mxu0
  %v248 = vpop.f32.mrb[0].mxu0
  %v249 = vadd.f32 0.0, %v248
  %v250 = vpop.f32.mrb[0].mxu0
  %251 = vmatprep.mubr.bf16.mxu0 0
  %252 = vmatmul.mubr.bf16.gmra.mrb[0].mxu0 %v120
  %v253 = vpop.f32.mrb[0].mxu0
  %v254 = vadd.f32 0.0, %v253
  %v255 = vpop.f32.mrb[0].mxu0
  %v256 = vpop.f32.mrb[0].mxu0
  %v257 = vadd.f32 0.0, %v256
  %v258 = vpop.f32.mrb[0].mxu0
  %259 = vmatprep.mubr.bf16.mxu0 0
  %260 = vmatmul.mubr.bf16.gmra.mrb[0].mxu0 %v121
  %v261 = vpop.f32.mrb[0].mxu0
  %v262 = vadd.f32 0.0, %v261
  %v263 = vpop.f32.mrb[0].mxu0
  %v264 = vpop.f32.mrb[0].mxu0
  %v265 = vadd.f32 0.0, %v264
  %v266 = vpop.f32.mrb[0].mxu0
  %267 = vmatprep.mubr.bf16.mxu0 0
  %268 = vmatmul.mubr.bf16.gmra.mrb[0].mxu0 %v122
  %v269 = vpop.f32.mrb[0].mxu0
  %v270 = vadd.f32 0.0, %v269
  %v271 = vpop.f32.mrb[0].mxu0
  %v272 = vpop.f32.mrb[0].mxu0
  %v273 = vadd.f32 0.0, %v272
  %v274 = vpop.f32.mrb[0].mxu0
  %275 = vdwg.mxu0
  %v276 = vadd.f32 %v35, %v214
  %v277 = vadd.f32 %v36, %v217
  %v278 = vadd.f32 %v37, %v222
  %v279 = vadd.f32 %v38, %v225
  %v280 = vadd.f32 %v39, %v230
  %v281 = vadd.f32 %v40, %v233
  %v282 = vadd.f32 %v41, %v238
  %v283 = vadd.f32 %v42, %v241
  %v284 = vadd.f32 %v43, %v246
  %v285 = vadd.f32 %v44, %v249
  %v286 = vadd.f32 %v45, %v254
  %v287 = vadd.f32 %v46, %v257
  %v288 = vadd.f32 %v47, %v262
  %v289 = vadd.f32 %v48, %v265
  %v290 = vadd.f32 %v49, %v270
  %v291 = vadd.f32 %v50, %v273
  %292 = vst [vmem:[#allocation2] sm:$0xff] %v276
  %293 = vst [vmem:[#allocation2 + $0x8] sm:$0xff] %v277
  %294 = vst [vmem:[#allocation2 + $0x10] sm:$0xff] %v278
  %295 = vst [vmem:[#allocation2 + $0x18] sm:$0xff] %v279
  %296 = vst [vmem:[#allocation2 + $0x20] sm:$0xff] %v280
  %297 = vst [vmem:[#allocation2 + $0x28] sm:$0xff] %v281
  %298 = vst [vmem:[#allocation2 + $0x30] sm:$0xff] %v282
  %299 = vst [vmem:[#allocation2 + $0x38] sm:$0xff] %v283
  %300 = vst [vmem:[#allocation2 + $0x40] sm:$0xff] %v284
  %301 = vst [vmem:[#allocation2 + $0x48] sm:$0xff] %v285
  %302 = vst [vmem:[#allocation2 + $0x50] sm:$0xff] %v286
  %303 = vst [vmem:[#allocation2 + $0x58] sm:$0xff] %v287
  %304 = vst [vmem:[#allocation2 + $0x60] sm:$0xff] %v288
  %305 = vst [vmem:[#allocation2 + $0x68] sm:$0xff] %v289
  %306 = vst [vmem:[#allocation2 + $0x70] sm:$0xff] %v290
  %307 = vst [vmem:[#allocation2 + $0x78] sm:$0xff] %v291
  // Predicated region
  $region18: #{_lambda_.6} parent=0 // pred_check
    %p308 = pneg %p15
  $region19: #{_lambda_.6} parent=0 // pred_check_branch
    %310 = sbr.rel (%p308) target = $region21
  $region20: #{_lambda_.6} parent=0 // pred_region
    %v311 = vld [vmem:[#allocation2] sm:$0xff]
    %v312 = vld [vmem:[#allocation2 + $0x8] sm:$0xff]
    %v313 = vld [vmem:[#allocation2 + $0x10] sm:$0xff]
    %v314 = vld [vmem:[#allocation2 + $0x18] sm:$0xff]
    %v315 = vld [vmem:[#allocation2 + $0x20] sm:$0xff]
    %v316 = vld [vmem:[#allocation2 + $0x28] sm:$0xff]
    %v317 = vld [vmem:[#allocation2 + $0x30] sm:$0xff]
    %v318 = vld [vmem:[#allocation2 + $0x38] sm:$0xff]
    %v319 = vld [vmem:[#allocation2 + $0x40] sm:$0xff]
    %v320 = vld [vmem:[#allocation2 + $0x48] sm:$0xff]
    %v321 = vld [vmem:[#allocation2 + $0x50] sm:$0xff]
    %v322 = vld [vmem:[#allocation2 + $0x58] sm:$0xff]
    %v323 = vld [vmem:[#allocation2 + $0x60] sm:$0xff]
    %v324 = vld [vmem:[#allocation2 + $0x68] sm:$0xff]
    %v325 = vld [vmem:[#allocation2 + $0x70] sm:$0xff]
    %v326 = vld [vmem:[#allocation2 + $0x78] sm:$0xff]
    %v327 = vld [vmem:[%s2] sm:$0x1]
    %v329 = vlaneseq
    %v330 = vshrl.u32 %v329, 7
    %v331 = vsub.s32 0, %v330
    %v332 = vrot.slane %v327, %v331
    %v334 = vadd.f32 %v311, %v332
    %v335 = vadd.f32 %v312, %v332
    %v336 = vadd.f32 %v313, %v332
    %v337 = vadd.f32 %v314, %v332
    %v338 = vadd.f32 %v315, %v332
    %v339 = vadd.f32 %v316, %v332
    %v340 = vadd.f32 %v317, %v332
    %v341 = vadd.f32 %v318, %v332
    %v342 = vadd.f32 %v319, %v332
    %v343 = vadd.f32 %v320, %v332
    %v344 = vadd.f32 %v321, %v332
    %v345 = vadd.f32 %v322, %v332
    %v346 = vadd.f32 %v323, %v332
    %v347 = vadd.f32 %v324, %v332
    %v348 = vadd.f32 %v325, %v332
    %v349 = vadd.f32 %v326, %v332
    %vm350 = vcmp.ge.f32.partialorder %v334, 0.0
    %vm351 = vcmp.ge.f32.partialorder %v335, 0.0
    %vm352 = vcmp.ge.f32.partialorder %v336, 0.0
    %vm353 = vcmp.ge.f32.partialorder %v337, 0.0
    %vm354 = vcmp.ge.f32.partialorder %v338, 0.0
    %vm355 = vcmp.ge.f32.partialorder %v339, 0.0
    %vm356 = vcmp.ge.f32.partialorder %v340, 0.0
    %vm357 = vcmp.ge.f32.partialorder %v341, 0.0
    %vm358 = vcmp.ge.f32.partialorder %v342, 0.0
    %vm359 = vcmp.ge.f32.partialorder %v343, 0.0
    %vm360 = vcmp.ge.f32.partialorder %v344, 0.0
    %vm361 = vcmp.ge.f32.partialorder %v345, 0.0
    %vm362 = vcmp.ge.f32.partialorder %v346, 0.0
    %vm363 = vcmp.ge.f32.partialorder %v347, 0.0
    %vm364 = vcmp.ge.f32.partialorder %v348, 0.0
    %vm365 = vcmp.ge.f32.partialorder %v349, 0.0
    %v366 = vmul.f32 %v334, 0.2
    %v367 = vmul.f32 %v335, 0.2
    %v368 = vmul.f32 %v336, 0.2
    %v369 = vmul.f32 %v337, 0.2
    %v370 = vmul.f32 %v338, 0.2
    %v371 = vmul.f32 %v339, 0.2
    %v372 = vmul.f32 %v340, 0.2
    %v373 = vmul.f32 %v341, 0.2
    %v374 = vmul.f32 %v342, 0.2
    %v375 = vmul.f32 %v343, 0.2
    %v376 = vmul.f32 %v344, 0.2
    %v377 = vmul.f32 %v345, 0.2
    %v378 = vmul.f32 %v346, 0.2
    %v379 = vmul.f32 %v347, 0.2
    %v380 = vmul.f32 %v348, 0.2
    %v381 = vmul.f32 %v349, 0.2
    %v382 = vsel %vm350, %v334, %v366
    %v383 = vsel %vm351, %v335, %v367
    %v384 = vsel %vm352, %v336, %v368
    %v385 = vsel %vm353, %v337, %v369
    %v386 = vsel %vm354, %v338, %v370
    %v387 = vsel %vm355, %v339, %v371
    %v388 = vsel %vm356, %v340, %v372
    %v389 = vsel %vm357, %v341, %v373
    %v390 = vsel %vm358, %v342, %v374
    %v391 = vsel %vm359, %v343, %v375
    %v392 = vsel %vm360, %v344, %v376
    %v393 = vsel %vm361, %v345, %v377
    %v394 = vsel %vm362, %v346, %v378
    %v395 = vsel %vm363, %v347, %v379
    %v396 = vsel %vm364, %v348, %v380
    %v397 = vsel %vm365, %v349, %v381
    %398 = vst [vmem:[%s3] sm:$0xff] %v382
    %399 = vst [vmem:[%s3 + $0x8] sm:$0xff] %v383
    %400 = vst [vmem:[%s3 + $0x10] sm:$0xff] %v384
    %401 = vst [vmem:[%s3 + $0x18] sm:$0xff] %v385
    %402 = vst [vmem:[%s3 + $0x20] sm:$0xff] %v386
    %403 = vst [vmem:[%s3 + $0x28] sm:$0xff] %v387
    %404 = vst [vmem:[%s3 + $0x30] sm:$0xff] %v388
    %405 = vst [vmem:[%s3 + $0x38] sm:$0xff] %v389
    %406 = vst [vmem:[%s3 + $0x40] sm:$0xff] %v390
    %407 = vst [vmem:[%s3 + $0x48] sm:$0xff] %v391
    %408 = vst [vmem:[%s3 + $0x50] sm:$0xff] %v392
    %409 = vst [vmem:[%s3 + $0x58] sm:$0xff] %v393
    %410 = vst [vmem:[%s3 + $0x60] sm:$0xff] %v394
    %411 = vst [vmem:[%s3 + $0x68] sm:$0xff] %v395
    %412 = vst [vmem:[%s3 + $0x70] sm:$0xff] %v396
    %413 = vst [vmem:[%s3 + $0x78] sm:$0xff] %v397
  $region21: #{_lambda_.6} parent=0 // pred_fallthru
    _
  // Predicated region
  $region22: #{_lambda_.6} parent=0 // pred_check
    _
  $region23: #{_lambda_.6} parent=0 // pred_check_branch
    %415 = sbr.rel (0) target = $region25
  $region24: #{_lambda_.6} parent=0 // pred_region
    _
  $region25: #{_lambda_.6} parent=0 // pred_fallthru
    _
  // Predicated region
  $region26: #{_lambda_.6} parent=0 // pred_check
    _
  $region27: #{_lambda_.6} parent=0 // pred_check_branch
    %417 = sbr.rel (0) target = $region29
  $region28: #{_lambda_.6} parent=0 // pred_region
    _
  $region29: #{_lambda_.6} parent=0 // pred_fallthru
    _

// kernel: _lambda_.7
$region0: #{_lambda_.7}
  #allocation0 [shape = 'u32[]', space=smem, size = 0x4, offset = 0x4, fixed_abs, tag = 'smem constant byte address 0x4 - core index']
  #allocation1 [shape = 'u32[144,128]{1,0:T(1,128)}', space=vmem, size = 0x12000, scoped, tag = 'internal scratch']
  #allocation2 [shape = 'f32[32,128]{1,0:T(8,128)}', space=vmem, size = 0x4000, scoped, tag = 'scratch operand']
  %s0 = inlined_call_operand.vmem [shape: bf16[32,256], index: 0, kind: input, shape index: {}]
  %s1 = inlined_call_operand.vmem [shape: bf16[256,128], index: 1, kind: input, shape index: {}]
  %s2 = inlined_call_operand.vmem [shape: f32[1,128], index: 2, kind: input, shape index: {}]
  %s3 = inlined_call_operand.vmem [shape: f32[32,128], index: 3, kind: output, shape index: {}]
  %s4 = sld [smem:[#allocation0]]
  $region30: #{_lambda_.7} parent=0
    _
  %s6 = ssub.s32 1, %s4
  %s7 = scalar_select 0, %s6, %s4
  // Predicated region
  $region2: #{_lambda_.7} parent=0 // pred_check
    _
  $region3: #{_lambda_.7} parent=0 // pred_check_branch
    %9 = sbr.rel (0) target = $region5
  $region4: #{_lambda_.7} parent=0 // pred_region
    _
  $region5: #{_lambda_.7} parent=0 // pred_fallthru
    _
  // Predicated region
  $region6: #{_lambda_.7} parent=0 // pred_check
    _
  $region7: #{_lambda_.7} parent=0 // pred_check_branch
    %11 = sbr.rel (0) target = $region9
  $region8: #{_lambda_.7} parent=0 // pred_region
    _
  $region9: #{_lambda_.7} parent=0 // pred_fallthru
    _
  // Predicated region
  $region10: #{_lambda_.7} parent=0 // pred_check
    _
  $region11: #{_lambda_.7} parent=0 // pred_check_branch
    %13 = sbr.rel (0) target = $region13
  $region12: #{_lambda_.7} parent=0 // pred_region
    _
  $region13: #{_lambda_.7} parent=0 // pred_fallthru
    _
  %p15 = scmp.eq.s32.totalorder 0, 0
  // Predicated region
  $region14: #{_lambda_.7} parent=0 // pred_check
    %p16 = pneg %p15
  $region15: #{_lambda_.7} parent=0 // pred_check_branch
    %18 = sbr.rel (%p16) target = $region17
  $region16: #{_lambda_.7} parent=0 // pred_region
    %19 = vst [vmem:[#allocation2] sm:$0xff] 0.0
    %20 = vst [vmem:[#allocation2 + $0x8] sm:$0xff] 0.0
    %21 = vst [vmem:[#allocation2 + $0x10] sm:$0xff] 0.0
    %22 = vst [vmem:[#allocation2 + $0x18] sm:$0xff] 0.0
  $region17: #{_lambda_.7} parent=0 // pred_fallthru
    _
  %v23 = vld [vmem:[#allocation2] sm:$0xff]
  %v24 = vld [vmem:[#allocation2 + $0x8] sm:$0xff]
  %v25 = vld [vmem:[#allocation2 + $0x10] sm:$0xff]
  %v26 = vld [vmem:[#allocation2 + $0x18] sm:$0xff]
  %v27 = vld [vmem:[%s0] sm:$0xff]
  %v28 = vld [vmem:[%s0 + $0x8] sm:$0xff]
  %v29 = vld [vmem:[%s0 + $0x10] sm:$0xff]
  %v30 = vld [vmem:[%s0 + $0x18] sm:$0xff]
  %v31 = vld [vmem:[%s1] sm:$0xf]
  %v32 = vld [vmem:[%s1 + $0x4] sm:$0xf]
  %v33 = vld [vmem:[%s1 + $0x8] sm:$0xf]
  %v34 = vld [vmem:[%s1 + $0xc] sm:$0xf]
  %v35 = vld [vmem:[%s1 + $0x10] sm:$0xf]
  %v36 = vld [vmem:[%s1 + $0x14] sm:$0xf]
  %v37 = vld [vmem:[%s1 + $0x18] sm:$0xf]
  %v38 = vld [vmem:[%s1 + $0x1c] sm:$0xf]
  %v39 = vld [vmem:[%s1 + $0x20] sm:$0xf]
  %v40 = vld [vmem:[%s1 + $0x24] sm:$0xf]
  %v41 = vld [vmem:[%s1 + $0x28] sm:$0xf]
  %v42 = vld [vmem:[%s1 + $0x2c] sm:$0xf]
  %v43 = vld [vmem:[%s1 + $0x30] sm:$0xf]
  %v44 = vld [vmem:[%s1 + $0x34] sm:$0xf]
  %v45 = vld [vmem:[%s1 + $0x38] sm:$0xf]
  %v46 = vld [vmem:[%s1 + $0x3c] sm:$0xf]
  %v47 = vld [vmem:[%s1 + $0x40] sm:$0xf]
  %v48 = vld [vmem:[%s1 + $0x44] sm:$0xf]
  %v49 = vld [vmem:[%s1 + $0x48] sm:$0xf]
  %v50 = vld [vmem:[%s1 + $0x4c] sm:$0xf]
  %v51 = vld [vmem:[%s1 + $0x50] sm:$0xf]
  %v52 = vld [vmem:[%s1 + $0x54] sm:$0xf]
  %v53 = vld [vmem:[%s1 + $0x58] sm:$0xf]
  %v54 = vld [vmem:[%s1 + $0x5c] sm:$0xf]
  %v55 = vld [vmem:[%s1 + $0x60] sm:$0xf]
  %v56 = vld [vmem:[%s1 + $0x64] sm:$0xf]
  %v57 = vld [vmem:[%s1 + $0x68] sm:$0xf]
  %v58 = vld [vmem:[%s1 + $0x6c] sm:$0xf]
  %v59 = vld [vmem:[%s1 + $0x70] sm:$0xf]
  %v60 = vld [vmem:[%s1 + $0x74] sm:$0xf]
  %v61 = vld [vmem:[%s1 + $0x78] sm:$0xf]
  %v62 = vld [vmem:[%s1 + $0x7c] sm:$0xf]
  %v67 = vunpack.c.l.b16 %v27
  %v68 = vunpack.c.h.b16 %v27
  %v69 = vunpack.c.l.b16 %v28
  %v70 = vunpack.c.h.b16 %v28
  %v71 = vunpack.c.l.b16 %v29
  %v72 = vunpack.c.h.b16 %v29
  %v73 = vunpack.c.l.b16 %v30
  %v74 = vunpack.c.h.b16 %v30
  %v75 = vpack.c.b16 %v69, %v67
  %v76 = vpack.c.b16 %v70, %v68
  %v77 = vpack.c.b16 %v73, %v71
  %v78 = vpack.c.b16 %v74, %v72
  %v115 = vunpack.c.l.b16 %v31
  %v116 = vunpack.c.l.b16 %v32
  %v117 = vunpack.c.l.b16 %v33
  %v118 = vunpack.c.l.b16 %v34
  %v119 = vunpack.c.l.b16 %v35
  %v120 = vunpack.c.l.b16 %v36
  %v121 = vunpack.c.l.b16 %v37
  %v122 = vunpack.c.l.b16 %v38
  %v123 = vunpack.c.l.b16 %v39
  %v124 = vunpack.c.l.b16 %v40
  %v125 = vunpack.c.l.b16 %v41
  %v126 = vunpack.c.l.b16 %v42
  %v127 = vunpack.c.l.b16 %v43
  %v128 = vunpack.c.l.b16 %v44
  %v129 = vunpack.c.l.b16 %v45
  %v130 = vunpack.c.l.b16 %v46
  %v131 = vunpack.c.l.b16 %v47
  %v132 = vunpack.c.l.b16 %v48
  %v133 = vunpack.c.l.b16 %v49
  %v134 = vunpack.c.l.b16 %v50
  %v135 = vunpack.c.l.b16 %v51
  %v136 = vunpack.c.l.b16 %v52
  %v137 = vunpack.c.l.b16 %v53
  %v138 = vunpack.c.l.b16 %v54
  %v139 = vunpack.c.l.b16 %v55
  %v140 = vunpack.c.l.b16 %v56
  %v141 = vunpack.c.l.b16 %v57
  %v142 = vunpack.c.l.b16 %v58
  %v143 = vunpack.c.l.b16 %v59
  %v144 = vunpack.c.l.b16 %v60
  %v145 = vunpack.c.l.b16 %v61
  %v146 = vunpack.c.l.b16 %v62
  %v147 = vpack.c.b16 %v116, %v115
  %v148 = vpack.c.b16 %v118, %v117
  %v149 = vpack.c.b16 %v120, %v119
  %v150 = vpack.c.b16 %v122, %v121
  %v151 = vpack.c.b16 %v124, %v123
  %v152 = vpack.c.b16 %v126, %v125
  %v153 = vpack.c.b16 %v128, %v127
  %v154 = vpack.c.b16 %v130, %v129
  %v155 = vpack.c.b16 %v132, %v131
  %v156 = vpack.c.b16 %v134, %v133
  %v157 = vpack.c.b16 %v136, %v135
  %v158 = vpack.c.b16 %v138, %v137
  %v159 = vpack.c.b16 %v140, %v139
  %v160 = vpack.c.b16 %v142, %v141
  %v161 = vpack.c.b16 %v144, %v143
  %v162 = vpack.c.b16 %v146, %v145
  %179 = vmatprep.subr.bf16.mxu0 0
  %180 = vmatpush1.bf16.msra.mxu0 %v147
  %181 = vmatprep.subr.bf16.mxu0 0
  %182 = vmatpush1.bf16.msra.mxu0 %v148
  %183 = vmatprep.subr.bf16.mxu0 0
  %184 = vmatpush1.bf16.msra.mxu0 %v149
  %185 = vmatprep.subr.bf16.mxu0 0
  %186 = vmatpush1.bf16.msra.mxu0 %v150
  %187 = vmatprep.subr.bf16.mxu0 0
  %188 = vmatpush1.bf16.msra.mxu0 %v151
  %189 = vmatprep.subr.bf16.mxu0 0
  %190 = vmatpush1.bf16.msra.mxu0 %v152
  %191 = vmatprep.subr.bf16.mxu0 0
  %192 = vmatpush1.bf16.msra.mxu0 %v153
  %193 = vmatprep.subr.bf16.mxu0 0
  %194 = vmatpush1.bf16.msra.mxu0 %v154
  %195 = vmatprep.subr.bf16.mxu0 0
  %196 = vmatpush1.bf16.msra.mxu0 %v155
  %197 = vmatprep.subr.bf16.mxu0 0
  %198 = vmatpush1.bf16.msra.mxu0 %v156
  %199 = vmatprep.subr.bf16.mxu0 0
  %200 = vmatpush1.bf16.msra.mxu0 %v157
  %201 = vmatprep.subr.bf16.mxu0 0
  %202 = vmatpush1.bf16.msra.mxu0 %v158
  %203 = vmatprep.subr.bf16.mxu0 0
  %204 = vmatpush1.bf16.msra.mxu0 %v159
  %205 = vmatprep.subr.bf16.mxu0 0
  %206 = vmatpush1.bf16.msra.mxu0 %v160
  %207 = vmatprep.subr.bf16.mxu0 0
  %208 = vmatpush1.bf16.msra.mxu0 %v161
  %209 = vmatprep.subr.bf16.mxu0 0
  %210 = vmatpush1.bf16.msra.mxu0 %v162
  %211 = vmatprep.mubr.bf16.mxu0 %v76
  %212 = vmatmul.mubr.bf16.gmra.mrb[0].mxu0 %v75
  %v213 = vpop.f32.mrb[0].mxu0
  %v214 = vadd.f32 0.0, %v213
  %v215 = vpop.f32.mrb[0].mxu0
  %v216 = vpop.f32.mrb[0].mxu0
  %v217 = vadd.f32 0.0, %v216
  %v218 = vpop.f32.mrb[0].mxu0
  %219 = vmatprep.mubr.bf16.mxu0 %v78
  %220 = vmatmul.mubr.bf16.gmra.mrb[0].mxu0 %v77
  %v221 = vpop.f32.mrb[0].mxu0
  %v222 = vadd.f32 0.0, %v221
  %v223 = vpop.f32.mrb[0].mxu0
  %v224 = vpop.f32.mrb[0].mxu0
  %v225 = vadd.f32 0.0, %v224
  %v226 = vpop.f32.mrb[0].mxu0
  %227 = vdwg.mxu0
  %v228 = vadd.f32 %v23, %v214
  %v229 = vadd.f32 %v24, %v217
  %v230 = vadd.f32 %v25, %v222
  %v231 = vadd.f32 %v26, %v225
  %232 = vst [vmem:[#allocation2] sm:$0xff] %v228
  %233 = vst [vmem:[#allocation2 + $0x8] sm:$0xff] %v229
  %234 = vst [vmem:[#allocation2 + $0x10] sm:$0xff] %v230
  %235 = vst [vmem:[#allocation2 + $0x18] sm:$0xff] %v231
  // Predicated region
  $region18: #{_lambda_.7} parent=0 // pred_check
    %p236 = pneg %p15
  $region19: #{_lambda_.7} parent=0 // pred_check_branch
    %238 = sbr.rel (%p236) target = $region21
  $region20: #{_lambda_.7} parent=0 // pred_region
    %v239 = vld [vmem:[#allocation2] sm:$0xff]
    %v240 = vld [vmem:[#allocation2 + $0x8] sm:$0xff]
    %v241 = vld [vmem:[#allocation2 + $0x10] sm:$0xff]
    %v242 = vld [vmem:[#allocation2 + $0x18] sm:$0xff]
    %v243 = vld [vmem:[%s2] sm:$0x1]
    %v245 = vlaneseq
    %v246 = vshrl.u32 %v245, 7
    %v247 = vsub.s32 0, %v246
    %v248 = vrot.slane %v243, %v247
    %v250 = vadd.f32 %v239, %v248
    %v251 = vadd.f32 %v240, %v248
    %v252 = vadd.f32 %v241, %v248
    %v253 = vadd.f32 %v242, %v248
    %vm254 = vcmp.ge.f32.partialorder %v250, 0.0
    %vm255 = vcmp.ge.f32.partialorder %v251, 0.0
    %vm256 = vcmp.ge.f32.partialorder %v252, 0.0
    %vm257 = vcmp.ge.f32.partialorder %v253, 0.0
    %v258 = vmul.f32 %v250, 0.2
    %v259 = vmul.f32 %v251, 0.2
    %v260 = vmul.f32 %v252, 0.2
    %v261 = vmul.f32 %v253, 0.2
    %v262 = vsel %vm254, %v250, %v258
    %v263 = vsel %vm255, %v251, %v259
    %v264 = vsel %vm256, %v252, %v260
    %v265 = vsel %vm257, %v253, %v261
    %266 = vst [vmem:[%s3] sm:$0xff] %v262
    %267 = vst [vmem:[%s3 + $0x8] sm:$0xff] %v263
    %268 = vst [vmem:[%s3 + $0x10] sm:$0xff] %v264
    %269 = vst [vmem:[%s3 + $0x18] sm:$0xff] %v265
  $region21: #{_lambda_.7} parent=0 // pred_fallthru
    _
  // Predicated region
  $region22: #{_lambda_.7} parent=0 // pred_check
    _
  $region23: #{_lambda_.7} parent=0 // pred_check_branch
    %271 = sbr.rel (0) target = $region25
  $region24: #{_lambda_.7} parent=0 // pred_region
    _
  $region25: #{_lambda_.7} parent=0 // pred_fallthru
    _
  // Predicated region
  $region26: #{_lambda_.7} parent=0 // pred_check
    _
  $region27: #{_lambda_.7} parent=0 // pred_check_branch
    %273 = sbr.rel (0) target = $region29
  $region28: #{_lambda_.7} parent=0 // pred_region
    _
  $region29: #{_lambda_.7} parent=0 // pred_fallthru
    _

// kernel: _lambda_.8
$region0: #{_lambda_.8}
  #allocation0 [shape = 'u32[]', space=smem, size = 0x4, offset = 0x4, fixed_abs, tag = 'smem constant byte address 0x4 - core index']
  #allocation1 [shape = 'u32[144,128]{1,0:T(1,128)}', space=vmem, size = 0x12000, scoped, tag = 'internal scratch']
  #allocation2 [shape = 'f32[24,128]{1,0:T(8,128)}', space=vmem, size = 0x3000, scoped, tag = 'scratch operand']
  %s0 = inlined_call_operand.vmem [shape: bf16[24,512], index: 0, kind: input, shape index: {}]
  %s1 = inlined_call_operand.vmem [shape: bf16[512,128], index: 1, kind: input, shape index: {}]
  %s2 = inlined_call_operand.vmem [shape: f32[1,128], index: 2, kind: input, shape index: {}]
  %s3 = inlined_call_operand.vmem [shape: f32[24,128], index: 3, kind: output, shape index: {}]
  %s4 = sld [smem:[#allocation0]]
  $region30: #{_lambda_.8} parent=0
    _
  %s6 = ssub.s32 1, %s4
  %s7 = scalar_select 0, %s6, %s4
  // Predicated region
  $region2: #{_lambda_.8} parent=0 // pred_check
    _
  $region3: #{_lambda_.8} parent=0 // pred_check_branch
    %9 = sbr.rel (0) target = $region5
  $region4: #{_lambda_.8} parent=0 // pred_region
    _
  $region5: #{_lambda_.8} parent=0 // pred_fallthru
    _
  // Predicated region
  $region6: #{_lambda_.8} parent=0 // pred_check
    _
  $region7: #{_lambda_.8} parent=0 // pred_check_branch
    %11 = sbr.rel (0) target = $region9
  $region8: #{_lambda_.8} parent=0 // pred_region
    _
  $region9: #{_lambda_.8} parent=0 // pred_fallthru
    _
  // Predicated region
  $region10: #{_lambda_.8} parent=0 // pred_check
    _
  $region11: #{_lambda_.8} parent=0 // pred_check_branch
    %13 = sbr.rel (0) target = $region13
  $region12: #{_lambda_.8} parent=0 // pred_region
    _
  $region13: #{_lambda_.8} parent=0 // pred_fallthru
    _
  %p15 = scmp.eq.s32.totalorder 0, 0
  // Predicated region
  $region14: #{_lambda_.8} parent=0 // pred_check
    %p16 = pneg %p15
  $region15: #{_lambda_.8} parent=0 // pred_check_branch
    %18 = sbr.rel (%p16) target = $region17
  $region16: #{_lambda_.8} parent=0 // pred_region
    %19 = vst [vmem:[#allocation2] sm:$0xff] 0.0
    %20 = vst [vmem:[#allocation2 + $0x8] sm:$0xff] 0.0
    %21 = vst [vmem:[#allocation2 + $0x10] sm:$0xff] 0.0
  $region17: #{_lambda_.8} parent=0 // pred_fallthru
    _
  %v22 = vld [vmem:[#allocation2] sm:$0xff]
  %v23 = vld [vmem:[#allocation2 + $0x8] sm:$0xff]
  %v24 = vld [vmem:[#allocation2 + $0x10] sm:$0xff]
  %v25 = vld [vmem:[%s0] sm:$0xff]
  %v26 = vld [vmem:[%s0 + $0x8] sm:$0xff]
  %v27 = vld [vmem:[%s0 + $0x10] sm:$0xff]
  %v28 = vld [vmem:[%s0 + $0x18] sm:$0xff]
  %v29 = vld [vmem:[%s0 + $0x20] sm:$0xff]
  %v30 = vld [vmem:[%s0 + $0x28] sm:$0xff]
  %v31 = vld [vmem:[%s1] sm:$0xf]
  %v32 = vld [vmem:[%s1 + $0x4] sm:$0xf]
  %v33 = vld [vmem:[%s1 + $0x8] sm:$0xf]
  %v34 = vld [vmem:[%s1 + $0xc] sm:$0xf]
  %v35 = vld [vmem:[%s1 + $0x10] sm:$0xf]
  %v36 = vld [vmem:[%s1 + $0x14] sm:$0xf]
  %v37 = vld [vmem:[%s1 + $0x18] sm:$0xf]
  %v38 = vld [vmem:[%s1 + $0x1c] sm:$0xf]
  %v39 = vld [vmem:[%s1 + $0x20] sm:$0xf]
  %v40 = vld [vmem:[%s1 + $0x24] sm:$0xf]
  %v41 = vld [vmem:[%s1 + $0x28] sm:$0xf]
  %v42 = vld [vmem:[%s1 + $0x2c] sm:$0xf]
  %v43 = vld [vmem:[%s1 + $0x30] sm:$0xf]
  %v44 = vld [vmem:[%s1 + $0x34] sm:$0xf]
  %v45 = vld [vmem:[%s1 + $0x38] sm:$0xf]
  %v46 = vld [vmem:[%s1 + $0x3c] sm:$0xf]
  %v47 = vld [vmem:[%s1 + $0x40] sm:$0xf]
  %v48 = vld [vmem:[%s1 + $0x44] sm:$0xf]
  %v49 = vld [vmem:[%s1 + $0x48] sm:$0xf]
  %v50 = vld [vmem:[%s1 + $0x4c] sm:$0xf]
  %v51 = vld [vmem:[%s1 + $0x50] sm:$0xf]
  %v52 = vld [vmem:[%s1 + $0x54] sm:$0xf]
  %v53 = vld [vmem:[%s1 + $0x58] sm:$0xf]
  %v54 = vld [vmem:[%s1 + $0x5c] sm:$0xf]
  %v55 = vld [vmem:[%s1 + $0x60] sm:$0xf]
  %v56 = vld [vmem:[%s1 + $0x64] sm:$0xf]
  %v57 = vld [vmem:[%s1 + $0x68] sm:$0xf]
  %v58 = vld [vmem:[%s1 + $0x6c] sm:$0xf]
  %v59 = vld [vmem:[%s1 + $0x70] sm:$0xf]
  %v60 = vld [vmem:[%s1 + $0x74] sm:$0xf]
  %v61 = vld [vmem:[%s1 + $0x78] sm:$0xf]
  %v62 = vld [vmem:[%s1 + $0x7c] sm:$0xf]
  %v63 = vld [vmem:[%s1 + $0x80] sm:$0xf]
  %v64 = vld [vmem:[%s1 + $0x84] sm:$0xf]
  %v65 = vld [vmem:[%s1 + $0x88] sm:$0xf]
  %v66 = vld [vmem:[%s1 + $0x8c] sm:$0xf]
  %v67 = vld [vmem:[%s1 + $0x90] sm:$0xf]
  %v68 = vld [vmem:[%s1 + $0x94] sm:$0xf]
  %v69 = vld [vmem:[%s1 + $0x98] sm:$0xf]
  %v70 = vld [vmem:[%s1 + $0x9c] sm:$0xf]
  %v71 = vld [vmem:[%s1 + $0xa0] sm:$0xf]
  %v72 = vld [vmem:[%s1 + $0xa4] sm:$0xf]
  %v73 = vld [vmem:[%s1 + $0xa8] sm:$0xf]
  %v74 = vld [vmem:[%s1 + $0xac] sm:$0xf]
  %v75 = vld [vmem:[%s1 + $0xb0] sm:$0xf]
  %v76 = vld [vmem:[%s1 + $0xb4] sm:$0xf]
  %v77 = vld [vmem:[%s1 + $0xb8] sm:$0xf]
  %v78 = vld [vmem:[%s1 + $0xbc] sm:$0xf]
  %v79 = vld [vmem:[%s1 + $0xc0] sm:$0xf]
  %v80 = vld [vmem:[%s1 + $0xc4] sm:$0xf]
  %v81 = vld [vmem:[%s1 + $0xc8] sm:$0xf]
  %v82 = vld [vmem:[%s1 + $0xcc] sm:$0xf]
  %v83 = vld [vmem:[%s1 + $0xd0] sm:$0xf]
  %v84 = vld [vmem:[%s1 + $0xd4] sm:$0xf]
  %v85 = vld [vmem:[%s1 + $0xd8] sm:$0xf]
  %v86 = vld [vmem:[%s1 + $0xdc] sm:$0xf]
  %v87 = vld [vmem:[%s1 + $0xe0] sm:$0xf]
  %v88 = vld [vmem:[%s1 + $0xe4] sm:$0xf]
  %v89 = vld [vmem:[%s1 + $0xe8] sm:$0xf]
  %v90 = vld [vmem:[%s1 + $0xec] sm:$0xf]
  %v91 = vld [vmem:[%s1 + $0xf0] sm:$0xf]
  %v92 = vld [vmem:[%s1 + $0xf4] sm:$0xf]
  %v93 = vld [vmem:[%s1 + $0xf8] sm:$0xf]
  %v94 = vld [vmem:[%s1 + $0xfc] sm:$0xf]
  %v101 = vunpack.c.l.b16 %v25
  %v102 = vunpack.c.h.b16 %v25
  %v103 = vunpack.c.l.b16 %v26
  %v104 = vunpack.c.h.b16 %v26
  %v105 = vunpack.c.l.b16 %v27
  %v106 = vunpack.c.h.b16 %v27
  %v107 = vunpack.c.l.b16 %v28
  %v108 = vunpack.c.h.b16 %v28
  %v109 = vunpack.c.l.b16 %v29
  %v110 = vunpack.c.h.b16 %v29
  %v111 = vunpack.c.l.b16 %v30
  %v112 = vunpack.c.h.b16 %v30
  %v113 = vpack.c.b16 %v105, %v101
  %v114 = vpack.c.b16 %v106, %v102
  %v115 = vpack.c.b16 %v107, %v103
  %v116 = vpack.c.b16 %v108, %v104
  %v117 = vpack.c.b16 %v109, %v109
  %v118 = vpack.c.b16 %v110, %v110
  %v119 = vpack.c.b16 %v111, %v111
  %v120 = vpack.c.b16 %v112, %v112
  %v193 = vunpack.c.l.b16 %v31
  %v194 = vunpack.c.l.b16 %v32
  %v195 = vunpack.c.l.b16 %v33
  %v196 = vunpack.c.l.b16 %v34
  %v197 = vunpack.c.l.b16 %v35
  %v198 = vunpack.c.l.b16 %v36
  %v199 = vunpack.c.l.b16 %v37
  %v200 = vunpack.c.l.b16 %v38
  %v201 = vunpack.c.l.b16 %v39
  %v202 = vunpack.c.l.b16 %v40
  %v203 = vunpack.c.l.b16 %v41
  %v204 = vunpack.c.l.b16 %v42
  %v205 = vunpack.c.l.b16 %v43
  %v206 = vunpack.c.l.b16 %v44
  %v207 = vunpack.c.l.b16 %v45
  %v208 = vunpack.c.l.b16 %v46
  %v209 = vunpack.c.l.b16 %v47
  %v210 = vunpack.c.l.b16 %v48
  %v211 = vunpack.c.l.b16 %v49
  %v212 = vunpack.c.l.b16 %v50
  %v213 = vunpack.c.l.b16 %v51
  %v214 = vunpack.c.l.b16 %v52
  %v215 = vunpack.c.l.b16 %v53
  %v216 = vunpack.c.l.b16 %v54
  %v217 = vunpack.c.l.b16 %v55
  %v218 = vunpack.c.l.b16 %v56
  %v219 = vunpack.c.l.b16 %v57
  %v220 = vunpack.c.l.b16 %v58
  %v221 = vunpack.c.l.b16 %v59
  %v222 = vunpack.c.l.b16 %v60
  %v223 = vunpack.c.l.b16 %v61
  %v224 = vunpack.c.l.b16 %v62
  %v225 = vunpack.c.l.b16 %v63
  %v226 = vunpack.c.l.b16 %v64
  %v227 = vunpack.c.l.b16 %v65
  %v228 = vunpack.c.l.b16 %v66
  %v229 = vunpack.c.l.b16 %v67
  %v230 = vunpack.c.l.b16 %v68
  %v231 = vunpack.c.l.b16 %v69
  %v232 = vunpack.c.l.b16 %v70
  %v233 = vunpack.c.l.b16 %v71
  %v234 = vunpack.c.l.b16 %v72
  %v235 = vunpack.c.l.b16 %v73
  %v236 = vunpack.c.l.b16 %v74
  %v237 = vunpack.c.l.b16 %v75
  %v238 = vunpack.c.l.b16 %v76
  %v239 = vunpack.c.l.b16 %v77
  %v240 = vunpack.c.l.b16 %v78
  %v241 = vunpack.c.l.b16 %v79
  %v242 = vunpack.c.l.b16 %v80
  %v243 = vunpack.c.l.b16 %v81
  %v244 = vunpack.c.l.b16 %v82
  %v245 = vunpack.c.l.b16 %v83
  %v246 = vunpack.c.l.b16 %v84
  %v247 = vunpack.c.l.b16 %v85
  %v248 = vunpack.c.l.b16 %v86
  %v249 = vunpack.c.l.b16 %v87
  %v250 = vunpack.c.l.b16 %v88
  %v251 = vunpack.c.l.b16 %v89
  %v252 = vunpack.c.l.b16 %v90
  %v253 = vunpack.c.l.b16 %v91
  %v254 = vunpack.c.l.b16 %v92
  %v255 = vunpack.c.l.b16 %v93
  %v256 = vunpack.c.l.b16 %v94
  %v257 = vpack.c.b16 %v194, %v193
  %v258 = vpack.c.b16 %v196, %v195
  %v259 = vpack.c.b16 %v198, %v197
  %v260 = vpack.c.b16 %v200, %v199
  %v261 = vpack.c.b16 %v202, %v201
  %v262 = vpack.c.b16 %v204, %v203
  %v263 = vpack.c.b16 %v206, %v205
  %v264 = vpack.c.b16 %v208, %v207
  %v265 = vpack.c.b16 %v210, %v209
  %v266 = vpack.c.b16 %v212, %v211
  %v267 = vpack.c.b16 %v214, %v213
  %v268 = vpack.c.b16 %v216, %v215
  %v269 = vpack.c.b16 %v218, %v217
  %v270 = vpack.c.b16 %v220, %v219
  %v271 = vpack.c.b16 %v222, %v221
  %v272 = vpack.c.b16 %v224, %v223
  %v273 = vpack.c.b16 %v226, %v225
  %v274 = vpack.c.b16 %v228, %v227
  %v275 = vpack.c.b16 %v230, %v229
  %v276 = vpack.c.b16 %v232, %v231
  %v277 = vpack.c.b16 %v234, %v233
  %v278 = vpack.c.b16 %v236, %v235
  %v279 = vpack.c.b16 %v238, %v237
  %v280 = vpack.c.b16 %v240, %v239
  %v281 = vpack.c.b16 %v242, %v241
  %v282 = vpack.c.b16 %v244, %v243
  %v283 = vpack.c.b16 %v246, %v245
  %v284 = vpack.c.b16 %v248, %v247
  %v285 = vpack.c.b16 %v250, %v249
  %v286 = vpack.c.b16 %v252, %v251
  %v287 = vpack.c.b16 %v254, %v253
  %v288 = vpack.c.b16 %v256, %v255
  %321 = vmatprep.subr.bf16.mxu0 0
  %322 = vmatpush1.bf16.msra.mxu0 %v257
  %323 = vmatprep.subr.bf16.mxu0 0
  %324 = vmatpush1.bf16.msra.mxu0 %v258
  %325 = vmatprep.subr.bf16.mxu0 0
  %326 = vmatpush1.bf16.msra.mxu0 %v259
  %327 = vmatprep.subr.bf16.mxu0 0
  %328 = vmatpush1.bf16.msra.mxu0 %v260
  %329 = vmatprep.subr.bf16.mxu0 0
  %330 = vmatpush1.bf16.msra.mxu0 %v261
  %331 = vmatprep.subr.bf16.mxu0 0
  %332 = vmatpush1.bf16.msra.mxu0 %v262
  %333 = vmatprep.subr.bf16.mxu0 0
  %334 = vmatpush1.bf16.msra.mxu0 %v263
  %335 = vmatprep.subr.bf16.mxu0 0
  %336 = vmatpush1.bf16.msra.mxu0 %v264
  %337 = vmatprep.subr.bf16.mxu0 0
  %338 = vmatpush1.bf16.msra.mxu0 %v265
  %339 = vmatprep.subr.bf16.mxu0 0
  %340 = vmatpush1.bf16.msra.mxu0 %v266
  %341 = vmatprep.subr.bf16.mxu0 0
  %342 = vmatpush1.bf16.msra.mxu0 %v267
  %343 = vmatprep.subr.bf16.mxu0 0
  %344 = vmatpush1.bf16.msra.mxu0 %v268
  %345 = vmatprep.subr.bf16.mxu0 0
  %346 = vmatpush1.bf16.msra.mxu0 %v269
  %347 = vmatprep.subr.bf16.mxu0 0
  %348 = vmatpush1.bf16.msra.mxu0 %v270
  %349 = vmatprep.subr.bf16.mxu0 0
  %350 = vmatpush1.bf16.msra.mxu0 %v271
  %351 = vmatprep.subr.bf16.mxu0 0
  %352 = vmatpush1.bf16.msra.mxu0 %v272
  %353 = vmatprep.mubr.bf16.mxu0 %v114
  %354 = vmatmul.mubr.bf16.gmra.mrb[0].mxu0 %v113
  %v355 = vpop.f32.mrb[0].mxu0
  %v356 = vadd.f32 0.0, %v355
  %v357 = vpop.f32.mrb[0].mxu0
  %v358 = vpop.f32.mrb[0].mxu0
  %v359 = vadd.f32 0.0, %v358
  %v360 = vpop.f32.mrb[0].mxu0
  %361 = vmatprep.mubr.bf16.mxu0 %v118
  %362 = vmatmul.mubr.bf16.gmra.mrb[0].mxu0 %v117
  %v363 = vpop.f32.mrb[0].mxu0
  %v364 = vadd.f32 0.0, %v363
  %v365 = vpop.f32.mrb[0].mxu0
  %v366 = vpop.f32.mrb[0].mxu0
  %v367 = vpop.f32.mrb[0].mxu0
  %368 = vdwg.mxu0
  %369 = vmatprep.subr.bf16.mxu0 0
  %370 = vmatpush1.bf16.msra.mxu0 %v273
  %371 = vmatprep.subr.bf16.mxu0 0
  %372 = vmatpush1.bf16.msra.mxu0 %v274
  %373 = vmatprep.subr.bf16.mxu0 0
  %374 = vmatpush1.bf16.msra.mxu0 %v275
  %375 = vmatprep.subr.bf16.mxu0 0
  %376 = vmatpush1.bf16.msra.mxu0 %v276
  %377 = vmatprep.subr.bf16.mxu0 0
  %378 = vmatpush1.bf16.msra.mxu0 %v277
  %379 = vmatprep.subr.bf16.mxu0 0
  %380 = vmatpush1.bf16.msra.mxu0 %v278
  %381 = vmatprep.subr.bf16.mxu0 0
  %382 = vmatpush1.bf16.msra.mxu0 %v279
  %383 = vmatprep.subr.bf16.mxu0 0
  %384 = vmatpush1.bf16.msra.mxu0 %v280
  %385 = vmatprep.subr.bf16.mxu0 0
  %386 = vmatpush1.bf16.msra.mxu0 %v281
  %387 = vmatprep.subr.bf16.mxu0 0
  %388 = vmatpush1.bf16.msra.mxu0 %v282
  %389 = vmatprep.subr.bf16.mxu0 0
  %390 = vmatpush1.bf16.msra.mxu0 %v283
  %391 = vmatprep.subr.bf16.mxu0 0
  %392 = vmatpush1.bf16.msra.mxu0 %v284
  %393 = vmatprep.subr.bf16.mxu0 0
  %394 = vmatpush1.bf16.msra.mxu0 %v285
  %395 = vmatprep.subr.bf16.mxu0 0
  %396 = vmatpush1.bf16.msra.mxu0 %v286
  %397 = vmatprep.subr.bf16.mxu0 0
  %398 = vmatpush1.bf16.msra.mxu0 %v287
  %399 = vmatprep.subr.bf16.mxu0 0
  %400 = vmatpush1.bf16.msra.mxu0 %v288
  %401 = vmatprep.mubr.bf16.mxu0 %v116
  %402 = vmatmul.mubr.bf16.gmra.mrb[0].mxu0 %v115
  %v403 = vpop.f32.mrb[0].mxu0
  %v404 = vadd.f32 %v356, %v403
  %v405 = vpop.f32.mrb[0].mxu0
  %v406 = vpop.f32.mrb[0].mxu0
  %v407 = vadd.f32 %v359, %v406
  %v408 = vpop.f32.mrb[0].mxu0
  %409 = vmatprep.mubr.bf16.mxu0 %v120
  %410 = vmatmul.mubr.bf16.gmra.mrb[0].mxu0 %v119
  %v411 = vpop.f32.mrb[0].mxu0
  %v412 = vadd.f32 %v364, %v411
  %v413 = vpop.f32.mrb[0].mxu0
  %v414 = vpop.f32.mrb[0].mxu0
  %v415 = vpop.f32.mrb[0].mxu0
  %416 = vdwg.mxu0
  %v417 = vadd.f32 %v22, %v404
  %v418 = vadd.f32 %v23, %v407
  %v419 = vadd.f32 %v24, %v412
  %420 = vst [vmem:[#allocation2] sm:$0xff] %v417
  %421 = vst [vmem:[#allocation2 + $0x8] sm:$0xff] %v418
  %422 = vst [vmem:[#allocation2 + $0x10] sm:$0xff] %v419
  // Predicated region
  $region18: #{_lambda_.8} parent=0 // pred_check
    %p423 = pneg %p15
  $region19: #{_lambda_.8} parent=0 // pred_check_branch
    %425 = sbr.rel (%p423) target = $region21
  $region20: #{_lambda_.8} parent=0 // pred_region
    %v426 = vld [vmem:[#allocation2] sm:$0xff]
    %v427 = vld [vmem:[#allocation2 + $0x8] sm:$0xff]
    %v428 = vld [vmem:[#allocation2 + $0x10] sm:$0xff]
    %v429 = vld [vmem:[%s2] sm:$0x1]
    %v431 = vlaneseq
    %v432 = vshrl.u32 %v431, 7
    %v433 = vsub.s32 0, %v432
    %v434 = vrot.slane %v429, %v433
    %v436 = vadd.f32 %v426, %v434
    %v437 = vadd.f32 %v427, %v434
    %v438 = vadd.f32 %v428, %v434
    %vm439 = vcmp.ge.f32.partialorder %v436, 0.0
    %vm440 = vcmp.ge.f32.partialorder %v437, 0.0
    %vm441 = vcmp.ge.f32.partialorder %v438, 0.0
    %v442 = vmul.f32 %v436, 0.2
    %v443 = vmul.f32 %v437, 0.2
    %v444 = vmul.f32 %v438, 0.2
    %v445 = vsel %vm439, %v436, %v442
    %v446 = vsel %vm440, %v437, %v443
    %v447 = vsel %vm441, %v438, %v444
    %448 = vst [vmem:[%s3] sm:$0xff] %v445
    %449 = vst [vmem:[%s3 + $0x8] sm:$0xff] %v446
    %450 = vst [vmem:[%s3 + $0x10] sm:$0xff] %v447
  $region21: #{_lambda_.8} parent=0 // pred_fallthru
    _
  // Predicated region
  $region22: #{_lambda_.8} parent=0 // pred_check
    _
  $region23: #{_lambda_.8} parent=0 // pred_check_branch
    %452 = sbr.rel (0) target = $region25
  $region24: #{_lambda_.8} parent=0 // pred_region
    _
  $region25: #{_lambda_.8} parent=0 // pred_fallthru
    _
  // Predicated region
  $region26: #{_lambda_.8} parent=0 // pred_check
    _
  $region27: #{_lambda_.8} parent=0 // pred_check_branch
    %454 = sbr.rel (0) target = $region29
  $region28: #{_lambda_.8} parent=0 // pred_region
    _
  $region29: #{_lambda_.8} parent=0 // pred_fallthru
    _

// kernel: _lambda_.9
$region0: #{_lambda_.9}
  #allocation0 [shape = 'u32[]', space=smem, size = 0x4, offset = 0x4, fixed_abs, tag = 'smem constant byte address 0x4 - core index']
  #allocation1 [shape = 'u32[144,128]{1,0:T(1,128)}', space=vmem, size = 0x12000, scoped, tag = 'internal scratch']
  #allocation2 [shape = 'f32[8,128]{1,0:T(8,128)}', space=vmem, size = 0x1000, scoped, tag = 'scratch operand']
  %s0 = inlined_call_operand.vmem [shape: bf16[8,1024], index: 0, kind: input, shape index: {}]
  %s1 = inlined_call_operand.vmem [shape: bf16[1024,128], index: 1, kind: input, shape index: {}]
  %s2 = inlined_call_operand.vmem [shape: f32[1,128], index: 2, kind: input, shape index: {}]
  %s3 = inlined_call_operand.vmem [shape: f32[8,128], index: 3, kind: output, shape index: {}]
  %s4 = sld [smem:[#allocation0]]
  $region53: #{_lambda_.9} parent=0
    _
  %s6 = ssub.s32 1, %s4
  %s7 = scalar_select 0, %s6, %s4
  loop: start=0, step=1, limit=4
  $region2: #{_lambda_.9} parent=0 // loop_pre_header
    _
  $region3: #{_lambda_.9} parent=0 // loop_header
    %s9 = sphi 0, %s13
    %p10 = scmp.ge.s32.totalorder %s9, 4
    %s16 = sphi 0, %s28
    %s17 = sphi 0, %s24
    %s18 = sphi 0, %s16
    %s19 = sphi 0, %s17
    %s20 = sphi 0, %s18
    %s21 = sphi 0, %s19
    %s33 = sphi 0, %s35
    %s36 = sphi 0, %s33
    %s37 = sphi 0, %s36
    %s53 = sphi 0, %s37
    %s59 = sphi 0, %s61
    %s62 = sphi 0, %s59
    %s63 = sphi 0, %s62
    %s79 = sphi 0, %s63
    %s83 = sphi 0, %s83
    %s85 = sphi 0, %s83
    %s86 = sphi 0, %s85
    %s100 = sphi 0, %s86
    %s106 = sphi 0, %s108
    %s109 = sphi 0, %s106
    %s110 = sphi 0, %s109
    %s126 = sphi 0, %s110
  $region4: #{_lambda_.9} parent=0 // loop_header_branch
    %12 = sbr.rel (%p10) target = $region8
  $region5: #{_lambda_.9} parent=0 // loop_body
    %s14 = ssub.s32 %s9, 1
    %s15 = ssub.s32 %s9, 2
    %s22 = sadd.s32 1, %s17
    %p23 = scmp.ge.s32.totalorder %s22, 2
    %s24 = scalar_select %p23, 0, %s22
    %s25 = sadd.s32 1, %s16
    %s26 = scalar_select %p23, %s25, %s16
    %p27 = scmp.ge.s32.totalorder %s26, 1
    %s28 = scalar_select %p27, 0, %s26
    %s29 = ssub.s32 %s16, %s28
    %s30 = ssub.s32 %s17, %s24
    %s31 = sor.u32 %s29, %s30
    %p32 = scmp.eq.s32.totalorder %s31, 0
    %s34 = sadd.s32 %s33, 1
    %s35 = scalar_select %p32, %s33, %s34
    %p38 = pneg %p32
    %p39 = scmp.eq.s32.totalorder %s9, 1
    %p40 = por %p38, %p39
    %p41 = scmp.ne.s32.totalorder %s33, %s36
    %p42 = scmp.eq.s32.totalorder %s9, 0
    %p43 = por %p41, %p42
    %p44 = scmp.ne.s32.totalorder %s33, %s36
    %p45 = scmp.eq.s32.totalorder %s14, 1
    %p46 = por %p44, %p45
    %p47 = scmp.ne.s32.totalorder %s36, %s37
    %p48 = scmp.eq.s32.totalorder %s14, 0
    %p49 = por %p47, %p48
    %p50 = scmp.ne.s32.totalorder %s36, %s37
    %p51 = scmp.eq.s32.totalorder %s15, 1
    %p52 = por %p50, %p51
    %p54 = scmp.ne.s32.totalorder %s37, %s53
    %p55 = scmp.eq.s32.totalorder %s15, 0
    %p56 = por %p54, %p55
    %s57 = ssub.s32 %s17, %s24
    %p58 = scmp.eq.s32.totalorder %s57, 0
    %s60 = sadd.s32 %s59, 1
    %s61 = scalar_select %p58, %s59, %s60
    %p64 = pneg %p58
    %p65 = scmp.eq.s32.totalorder %s9, 1
    %p66 = por %p64, %p65
    %p67 = scmp.ne.s32.totalorder %s59, %s62
    %p68 = scmp.eq.s32.totalorder %s9, 0
    %p69 = por %p67, %p68
    %p70 = scmp.ne.s32.totalorder %s59, %s62
    %p71 = scmp.eq.s32.totalorder %s14, 1
    %p72 = por %p70, %p71
    %p73 = scmp.ne.s32.totalorder %s62, %s63
    %p74 = scmp.eq.s32.totalorder %s14, 0
    %p75 = por %p73, %p74
    %p76 = scmp.ne.s32.totalorder %s62, %s63
    %p77 = scmp.eq.s32.totalorder %s15, 1
    %p78 = por %p76, %p77
    %p80 = scmp.ne.s32.totalorder %s63, %s79
    %p81 = scmp.eq.s32.totalorder %s15, 0
    %p82 = por %p80, %p81
    %s84 = sadd.s32 %s83, 1
    %p87 = scmp.eq.s32.totalorder %s9, 1
    %p88 = scmp.ne.s32.totalorder %s83, %s85
    %p89 = scmp.eq.s32.totalorder %s9, 0
    %p90 = por %p88, %p89
    %p91 = scmp.ne.s32.totalorder %s83, %s85
    %p92 = scmp.eq.s32.totalorder %s14, 1
    %p93 = por %p91, %p92
    %p94 = scmp.ne.s32.totalorder %s85, %s86
    %p95 = scmp.eq.s32.totalorder %s14, 0
    %p96 = por %p94, %p95
    %p97 = scmp.ne.s32.totalorder %s85, %s86
    %p98 = scmp.eq.s32.totalorder %s15, 1
    %p99 = por %p97, %p98
    %p101 = scmp.ne.s32.totalorder %s86, %s100
    %p102 = scmp.eq.s32.totalorder %s15, 0
    %p103 = por %p101, %p102
    %s104 = ssub.s32 %s16, %s28
    %p105 = scmp.eq.s32.totalorder %s104, 0
    %s107 = sadd.s32 %s106, 1
    %s108 = scalar_select %p105, %s106, %s107
    %p111 = pneg %p105
    %p112 = scmp.eq.s32.totalorder %s9, 1
    %p113 = por %p111, %p112
    %p114 = scmp.ne.s32.totalorder %s106, %s109
    %p115 = scmp.eq.s32.totalorder %s9, 0
    %p116 = por %p114, %p115
    %p117 = scmp.ne.s32.totalorder %s106, %s109
    %p118 = scmp.eq.s32.totalorder %s14, 1
    %p119 = por %p117, %p118
    %p120 = scmp.ne.s32.totalorder %s109, %s110
    %p121 = scmp.eq.s32.totalorder %s14, 0
    %p122 = por %p120, %p121
    %p123 = scmp.ne.s32.totalorder %s109, %s110
    %p124 = scmp.eq.s32.totalorder %s15, 1
    %p125 = por %p123, %p124
    %p127 = scmp.ne.s32.totalorder %s110, %s126
    %p128 = scmp.eq.s32.totalorder %s15, 0
    %p129 = por %p127, %p128
    %p130 = scmp.le.s32.totalorder 1, %s9
    %p131 = scmp.lt.s32.totalorder %s9, 3
    %p132 = pnand %p130, %p131
    %p133 = pneg %p132
    // Predicated region
    $region9: #{_lambda_.9} parent=5 // pred_check
      _
    $region10: #{_lambda_.9} parent=5 // pred_check_branch
      %135 = sbr.rel (%p132) target = $region12
    $region11: #{_lambda_.9} parent=5 // pred_region
      %s136 = ssub.s32 %s9, 1
      // Predicated region
      $region13: #{_lambda_.9} parent=11 // pred_check
        %p137 = pneg %p96
      $region14: #{_lambda_.9} parent=11 // pred_check_branch
        %139 = sbr.rel (%p137) target = $region16
      $region15: #{_lambda_.9} parent=11 // pred_region
        _
      $region16: #{_lambda_.9} parent=11 // pred_fallthru
        _
    $region12: #{_lambda_.9} parent=5 // pred_fallthru
      _
    %p140 = scmp.lt.s32.totalorder %s9, 2
    // Predicated region
    $region17: #{_lambda_.9} parent=5 // pred_check
      %p141 = pneg %p140
    $region18: #{_lambda_.9} parent=5 // pred_check_branch
      %143 = sbr.rel (%p141) target = $region20
    $region19: #{_lambda_.9} parent=5 // pred_region
      // Predicated region
      $region21: #{_lambda_.9} parent=19 // pred_check
        %p144 = pneg %p43
      $region22: #{_lambda_.9} parent=19 // pred_check_branch
        %146 = sbr.rel (%p144) target = $region24
      $region23: #{_lambda_.9} parent=19 // pred_region
        %s147 = smul.u32 4, %s17
        %p148 = scmp.lt.s32.totalorder %s16, 0
        %s149 = scalar_select %p148, %s16, 0
        %p150 = scmp.lt.s32.totalorder %s147, 7
        %s151 = scalar_select %p150, %s147, 7
        %s152 = smul.addr %s149, 8
        %s153 = sadd.s32 %s151, %s152
        %s154 = smul.addr %s153, 4
        %s155 = scalar_lea.vmem %s0, %s154
        %s156 = smul.u32 4, %s17
      $region24: #{_lambda_.9} parent=19 // pred_fallthru
        _
      // Predicated region
      $region25: #{_lambda_.9} parent=19 // pred_check
        %p157 = pneg %p69
      $region26: #{_lambda_.9} parent=19 // pred_check_branch
        %159 = sbr.rel (%p157) target = $region28
      $region27: #{_lambda_.9} parent=19 // pred_region
        %s160 = smul.u32 64, %s17
        %p161 = scmp.lt.s32.totalorder %s160, 127
        %s162 = scalar_select %p161, %s160, 127
        %s163 = smul.addr %s162, 4
        %s164 = scalar_lea.vmem %s1, %s163
        %s165 = smul.u32 64, %s17
      $region28: #{_lambda_.9} parent=19 // pred_fallthru
        _
    $region20: #{_lambda_.9} parent=5 // pred_fallthru
      _
    %p166 = scmp.le.s32.totalorder 1, %s9
    %p167 = scmp.lt.s32.totalorder %s9, 3
    %p168 = pnand %p166, %p167
    %p169 = pneg %p168
    // Predicated region
    $region29: #{_lambda_.9} parent=5 // pred_check
      _
    $region30: #{_lambda_.9} parent=5 // pred_check_branch
      %171 = sbr.rel (%p168) target = $region32
    $region31: #{_lambda_.9} parent=5 // pred_region
      %s172 = ssub.s32 %s9, 1
      %s173 = smul.u32 4, %s19
      %p174 = scmp.lt.s32.totalorder %s18, 0
      %s175 = scalar_select %p174, %s18, 0
      %p176 = scmp.lt.s32.totalorder %s173, 7
      %s177 = scalar_select %p176, %s173, 7
      %s178 = smul.addr %s175, 8
      %s179 = sadd.s32 %s177, %s178
      %s180 = smul.addr %s179, 4
      %s181 = scalar_lea.vmem %s0, %s180
      %p182 = pneg %p49
      %p183 = pneg %p46
      %s184 = smul.u32 64, %s19
      %p185 = scmp.lt.s32.totalorder %s184, 127
      %s186 = scalar_select %p185, %s184, 127
      %s187 = smul.addr %s186, 4
      %s188 = scalar_lea.vmem %s1, %s187
      %p189 = pneg %p75
      %p190 = pneg %p72
      %p191 = pneg %p96
      %p192 = pneg %p93
      %p193 = pneg %p122
      %p194 = pneg %p119
      %p195 = scmp.lt.s32.totalorder %s18, 0
      %s196 = scalar_select %p195, %s18, 0
      %s197 = smul.addr %s196, 8
      %s198 = scalar_lea.vmem %s3, %s197
      %s199 = smul.u32 4, %s19
      %p200 = scmp.lt.s32.totalorder %s18, 0
      %s201 = scalar_select %p200, %s18, 0
      %p202 = scmp.lt.s32.totalorder %s199, 7
      %s203 = scalar_select %p202, %s199, 7
      %s204 = smul.addr %s201, 8
      %s205 = sadd.s32 %s203, %s204
      %s206 = smul.addr %s205, 4
      %s207 = scalar_lea.vmem %s0, %s206
      %s208 = smul.u32 4, %s19
      %s209 = smul.u32 64, %s19
      %p210 = scmp.lt.s32.totalorder %s209, 127
      %s211 = scalar_select %p210, %s209, 127
      %s212 = smul.addr %s211, 4
      %s213 = scalar_lea.vmem %s1, %s212
      %s214 = smul.u32 64, %s19
      %p215 = scmp.lt.s32.totalorder %s18, 0
      %s216 = scalar_select %p215, %s18, 0
      %s217 = smul.addr %s216, 8
      %s218 = scalar_lea.vmem %s3, %s217
      %p220 = scmp.eq.s32.totalorder %s19, 0
      // Predicated region
      $region33: #{_lambda_.9} parent=31 // pred_check
        %p221 = pneg %p220
      $region34: #{_lambda_.9} parent=31 // pred_check_branch
        %223 = sbr.rel (%p221) target = $region36
      $region35: #{_lambda_.9} parent=31 // pred_region
        %224 = vst [vmem:[#allocation2] sm:$0xff] 0.0
      $region36: #{_lambda_.9} parent=31 // pred_fallthru
        _
      %v225 = vld [vmem:[#allocation2] sm:$0xff]
      %v226 = vld [vmem:[%s207] sm:$0xff]
      %v227 = vld [vmem:[%s207 + $0x8] sm:$0xff]
      %v228 = vld [vmem:[%s213] sm:$0xf]
      %v229 = vld [vmem:[%s213 + $0x4] sm:$0xf]
      %v230 = vld [vmem:[%s213 + $0x8] sm:$0xf]
      %v231 = vld [vmem:[%s213 + $0xc] sm:$0xf]
      %v232 = vld [vmem:[%s213 + $0x10] sm:$0xf]
      %v233 = vld [vmem:[%s213 + $0x14] sm:$0xf]
      %v234 = vld [vmem:[%s213 + $0x18] sm:$0xf]
      %v235 = vld [vmem:[%s213 + $0x1c] sm:$0xf]
      %v236 = vld [vmem:[%s213 + $0x20] sm:$0xf]
      %v237 = vld [vmem:[%s213 + $0x24] sm:$0xf]
      %v238 = vld [vmem:[%s213 + $0x28] sm:$0xf]
      %v239 = vld [vmem:[%s213 + $0x2c] sm:$0xf]
      %v240 = vld [vmem:[%s213 + $0x30] sm:$0xf]
      %v241 = vld [vmem:[%s213 + $0x34] sm:$0xf]
      %v242 = vld [vmem:[%s213 + $0x38] sm:$0xf]
      %v243 = vld [vmem:[%s213 + $0x3c] sm:$0xf]
      %v244 = vld [vmem:[%s213 + $0x40] sm:$0xf]
      %v245 = vld [vmem:[%s213 + $0x44] sm:$0xf]
      %v246 = vld [vmem:[%s213 + $0x48] sm:$0xf]
      %v247 = vld [vmem:[%s213 + $0x4c] sm:$0xf]
      %v248 = vld [vmem:[%s213 + $0x50] sm:$0xf]
      %v249 = vld [vmem:[%s213 + $0x54] sm:$0xf]
      %v250 = vld [vmem:[%s213 + $0x58] sm:$0xf]
      %v251 = vld [vmem:[%s213 + $0x5c] sm:$0xf]
      %v252 = vld [vmem:[%s213 + $0x60] sm:$0xf]
      %v253 = vld [vmem:[%s213 + $0x64] sm:$0xf]
      %v254 = vld [vmem:[%s213 + $0x68] sm:$0xf]
      %v255 = vld [vmem:[%s213 + $0x6c] sm:$0xf]
      %v256 = vld [vmem:[%s213 + $0x70] sm:$0xf]
      %v257 = vld [vmem:[%s213 + $0x74] sm:$0xf]
      %v258 = vld [vmem:[%s213 + $0x78] sm:$0xf]
      %v259 = vld [vmem:[%s213 + $0x7c] sm:$0xf]
      %v260 = vld [vmem:[%s213 + $0x80] sm:$0xf]
      %v261 = vld [vmem:[%s213 + $0x84] sm:$0xf]
      %v262 = vld [vmem:[%s213 + $0x88] sm:$0xf]
      %v263 = vld [vmem:[%s213 + $0x8c] sm:$0xf]
      %v264 = vld [vmem:[%s213 + $0x90] sm:$0xf]
      %v265 = vld [vmem:[%s213 + $0x94] sm:$0xf]
      %v266 = vld [vmem:[%s213 + $0x98] sm:$0xf]
      %v267 = vld [vmem:[%s213 + $0x9c] sm:$0xf]
      %v268 = vld [vmem:[%s213 + $0xa0] sm:$0xf]
      %v269 = vld [vmem:[%s213 + $0xa4] sm:$0xf]
      %v270 = vld [vmem:[%s213 + $0xa8] sm:$0xf]
      %v271 = vld [vmem:[%s213 + $0xac] sm:$0xf]
      %v272 = vld [vmem:[%s213 + $0xb0] sm:$0xf]
      %v273 = vld [vmem:[%s213 + $0xb4] sm:$0xf]
      %v274 = vld [vmem:[%s213 + $0xb8] sm:$0xf]
      %v275 = vld [vmem:[%s213 + $0xbc] sm:$0xf]
      %v276 = vld [vmem:[%s213 + $0xc0] sm:$0xf]
      %v277 = vld [vmem:[%s213 + $0xc4] sm:$0xf]
      %v278 = vld [vmem:[%s213 + $0xc8] sm:$0xf]
      %v279 = vld [vmem:[%s213 + $0xcc] sm:$0xf]
      %v280 = vld [vmem:[%s213 + $0xd0] sm:$0xf]
      %v281 = vld [vmem:[%s213 + $0xd4] sm:$0xf]
      %v282 = vld [vmem:[%s213 + $0xd8] sm:$0xf]
      %v283 = vld [vmem:[%s213 + $0xdc] sm:$0xf]
      %v284 = vld [vmem:[%s213 + $0xe0] sm:$0xf]
      %v285 = vld [vmem:[%s213 + $0xe4] sm:$0xf]
      %v286 = vld [vmem:[%s213 + $0xe8] sm:$0xf]
      %v287 = vld [vmem:[%s213 + $0xec] sm:$0xf]
      %v288 = vld [vmem:[%s213 + $0xf0] sm:$0xf]
      %v289 = vld [vmem:[%s213 + $0xf4] sm:$0xf]
      %v290 = vld [vmem:[%s213 + $0xf8] sm:$0xf]
      %v291 = vld [vmem:[%s213 + $0xfc] sm:$0xf]
      %v294 = vunpack.c.l.b16 %v226
      %v295 = vunpack.c.h.b16 %v226
      %v296 = vunpack.c.l.b16 %v227
      %v297 = vunpack.c.h.b16 %v227
      %v298 = vpack.c.b16 %v294, %v294
      %v299 = vpack.c.b16 %v295, %v295
      %v300 = vpack.c.b16 %v296, %v296
      %v301 = vpack.c.b16 %v297, %v297
      %v370 = vunpack.c.l.b16 %v228
      %v371 = vunpack.c.l.b16 %v229
      %v372 = vunpack.c.l.b16 %v230
      %v373 = vunpack.c.l.b16 %v231
      %v374 = vunpack.c.l.b16 %v232
      %v375 = vunpack.c.l.b16 %v233
      %v376 = vunpack.c.l.b16 %v234
      %v377 = vunpack.c.l.b16 %v235
      %v378 = vunpack.c.l.b16 %v236
      %v379 = vunpack.c.l.b16 %v237
      %v380 = vunpack.c.l.b16 %v238
      %v381 = vunpack.c.l.b16 %v239
      %v382 = vunpack.c.l.b16 %v240
      %v383 = vunpack.c.l.b16 %v241
      %v384 = vunpack.c.l.b16 %v242
      %v385 = vunpack.c.l.b16 %v243
      %v386 = vunpack.c.l.b16 %v244
      %v387 = vunpack.c.l.b16 %v245
      %v388 = vunpack.c.l.b16 %v246
      %v389 = vunpack.c.l.b16 %v247
      %v390 = vunpack.c.l.b16 %v248
      %v391 = vunpack.c.l.b16 %v249
      %v392 = vunpack.c.l.b16 %v250
      %v393 = vunpack.c.l.b16 %v251
      %v394 = vunpack.c.l.b16 %v252
      %v395 = vunpack.c.l.b16 %v253
      %v396 = vunpack.c.l.b16 %v254
      %v397 = vunpack.c.l.b16 %v255
      %v398 = vunpack.c.l.b16 %v256
      %v399 = vunpack.c.l.b16 %v257
      %v400 = vunpack.c.l.b16 %v258
      %v401 = vunpack.c.l.b16 %v259
      %v402 = vunpack.c.l.b16 %v260
      %v403 = vunpack.c.l.b16 %v261
      %v404 = vunpack.c.l.b16 %v262
      %v405 = vunpack.c.l.b16 %v263
      %v406 = vunpack.c.l.b16 %v264
      %v407 = vunpack.c.l.b16 %v265
      %v408 = vunpack.c.l.b16 %v266
      %v409 = vunpack.c.l.b16 %v267
      %v410 = vunpack.c.l.b16 %v268
      %v411 = vunpack.c.l.b16 %v269
      %v412 = vunpack.c.l.b16 %v270
      %v413 = vunpack.c.l.b16 %v271
      %v414 = vunpack.c.l.b16 %v272
      %v415 = vunpack.c.l.b16 %v273
      %v416 = vunpack.c.l.b16 %v274
      %v417 = vunpack.c.l.b16 %v275
      %v418 = vunpack.c.l.b16 %v276
      %v419 = vunpack.c.l.b16 %v277
      %v420 = vunpack.c.l.b16 %v278
      %v421 = vunpack.c.l.b16 %v279
      %v422 = vunpack.c.l.b16 %v280
      %v423 = vunpack.c.l.b16 %v281
      %v424 = vunpack.c.l.b16 %v282
      %v425 = vunpack.c.l.b16 %v283
      %v426 = vunpack.c.l.b16 %v284
      %v427 = vunpack.c.l.b16 %v285
      %v428 = vunpack.c.l.b16 %v286
      %v429 = vunpack.c.l.b16 %v287
      %v430 = vunpack.c.l.b16 %v288
      %v431 = vunpack.c.l.b16 %v289
      %v432 = vunpack.c.l.b16 %v290
      %v433 = vunpack.c.l.b16 %v291
      %v434 = vpack.c.b16 %v371, %v370
      %v435 = vpack.c.b16 %v373, %v372
      %v436 = vpack.c.b16 %v375, %v374
      %v437 = vpack.c.b16 %v377, %v376
      %v438 = vpack.c.b16 %v379, %v378
      %v439 = vpack.c.b16 %v381, %v380
      %v440 = vpack.c.b16 %v383, %v382
      %v441 = vpack.c.b16 %v385, %v384
      %v442 = vpack.c.b16 %v387, %v386
      %v443 = vpack.c.b16 %v389, %v388
      %v444 = vpack.c.b16 %v391, %v390
      %v445 = vpack.c.b16 %v393, %v392
      %v446 = vpack.c.b16 %v395, %v394
      %v447 = vpack.c.b16 %v397, %v396
      %v448 = vpack.c.b16 %v399, %v398
      %v449 = vpack.c.b16 %v401, %v400
      %v450 = vpack.c.b16 %v403, %v402
      %v451 = vpack.c.b16 %v405, %v404
      %v452 = vpack.c.b16 %v407, %v406
      %v453 = vpack.c.b16 %v409, %v408
      %v454 = vpack.c.b16 %v411, %v410
      %v455 = vpack.c.b16 %v413, %v412
      %v456 = vpack.c.b16 %v415, %v414
      %v457 = vpack.c.b16 %v417, %v416
      %v458 = vpack.c.b16 %v419, %v418
      %v459 = vpack.c.b16 %v421, %v420
      %v460 = vpack.c.b16 %v423, %v422
      %v461 = vpack.c.b16 %v425, %v424
      %v462 = vpack.c.b16 %v427, %v426
      %v463 = vpack.c.b16 %v429, %v428
      %v464 = vpack.c.b16 %v431, %v430
      %v465 = vpack.c.b16 %v433, %v432
      %498 = vmatprep.subr.bf16.mxu0 0
      %499 = vmatpush1.bf16.msra.mxu0 %v434
      %500 = vmatprep.subr.bf16.mxu0 0
      %501 = vmatpush1.bf16.msra.mxu0 %v435
      %502 = vmatprep.subr.bf16.mxu0 0
      %503 = vmatpush1.bf16.msra.mxu0 %v436
      %504 = vmatprep.subr.bf16.mxu0 0
      %505 = vmatpush1.bf16.msra.mxu0 %v437
      %506 = vmatprep.subr.bf16.mxu0 0
      %507 = vmatpush1.bf16.msra.mxu0 %v438
      %508 = vmatprep.subr.bf16.mxu0 0
      %509 = vmatpush1.bf16.msra.mxu0 %v439
      %510 = vmatprep.subr.bf16.mxu0 0
      %511 = vmatpush1.bf16.msra.mxu0 %v440
      %512 = vmatprep.subr.bf16.mxu0 0
      %513 = vmatpush1.bf16.msra.mxu0 %v441
      %514 = vmatprep.subr.bf16.mxu0 0
      %515 = vmatpush1.bf16.msra.mxu0 %v442
      %516 = vmatprep.subr.bf16.mxu0 0
      %517 = vmatpush1.bf16.msra.mxu0 %v443
      %518 = vmatprep.subr.bf16.mxu0 0
      %519 = vmatpush1.bf16.msra.mxu0 %v444
      %520 = vmatprep.subr.bf16.mxu0 0
      %521 = vmatpush1.bf16.msra.mxu0 %v445
      %522 = vmatprep.subr.bf16.mxu0 0
      %523 = vmatpush1.bf16.msra.mxu0 %v446
      %524 = vmatprep.subr.bf16.mxu0 0
      %525 = vmatpush1.bf16.msra.mxu0 %v447
      %526 = vmatprep.subr.bf16.mxu0 0
      %527 = vmatpush1.bf16.msra.mxu0 %v448
      %528 = vmatprep.subr.bf16.mxu0 0
      %529 = vmatpush1.bf16.msra.mxu0 %v449
      %530 = vmatprep.mubr.bf16.mxu0 %v299
      %531 = vmatmul.mubr.bf16.gmra.mrb[0].mxu0 %v298
      %v532 = vpop.f32.mrb[0].mxu0
      %v533 = vadd.f32 0.0, %v532
      %v534 = vpop.f32.mrb[0].mxu0
      %v535 = vpop.f32.mrb[0].mxu0
      %v536 = vpop.f32.mrb[0].mxu0
      %537 = vdwg.mxu0
      %538 = vmatprep.subr.bf16.mxu0 0
      %539 = vmatpush1.bf16.msra.mxu0 %v450
      %540 = vmatprep.subr.bf16.mxu0 0
      %541 = vmatpush1.bf16.msra.mxu0 %v451
      %542 = vmatprep.subr.bf16.mxu0 0
      %543 = vmatpush1.bf16.msra.mxu0 %v452
      %544 = vmatprep.subr.bf16.mxu0 0
      %545 = vmatpush1.bf16.msra.mxu0 %v453
      %546 = vmatprep.subr.bf16.mxu0 0
      %547 = vmatpush1.bf16.msra.mxu0 %v454
      %548 = vmatprep.subr.bf16.mxu0 0
      %549 = vmatpush1.bf16.msra.mxu0 %v455
      %550 = vmatprep.subr.bf16.mxu0 0
      %551 = vmatpush1.bf16.msra.mxu0 %v456
      %552 = vmatprep.subr.bf16.mxu0 0
      %553 = vmatpush1.bf16.msra.mxu0 %v457
      %554 = vmatprep.subr.bf16.mxu0 0
      %555 = vmatpush1.bf16.msra.mxu0 %v458
      %556 = vmatprep.subr.bf16.mxu0 0
      %557 = vmatpush1.bf16.msra.mxu0 %v459
      %558 = vmatprep.subr.bf16.mxu0 0
      %559 = vmatpush1.bf16.msra.mxu0 %v460
      %560 = vmatprep.subr.bf16.mxu0 0
      %561 = vmatpush1.bf16.msra.mxu0 %v461
      %562 = vmatprep.subr.bf16.mxu0 0
      %563 = vmatpush1.bf16.msra.mxu0 %v462
      %564 = vmatprep.subr.bf16.mxu0 0
      %565 = vmatpush1.bf16.msra.mxu0 %v463
      %566 = vmatprep.subr.bf16.mxu0 0
      %567 = vmatpush1.bf16.msra.mxu0 %v464
      %568 = vmatprep.subr.bf16.mxu0 0
      %569 = vmatpush1.bf16.msra.mxu0 %v465
      %570 = vmatprep.mubr.bf16.mxu0 %v301
      %571 = vmatmul.mubr.bf16.gmra.mrb[0].mxu0 %v300
      %v572 = vpop.f32.mrb[0].mxu0
      %v573 = vadd.f32 %v533, %v572
      %v574 = vpop.f32.mrb[0].mxu0
      %v575 = vpop.f32.mrb[0].mxu0
      %v576 = vpop.f32.mrb[0].mxu0
      %577 = vdwg.mxu0
      %v578 = vadd.f32 %v225, %v573
      %579 = vst [vmem:[#allocation2] sm:$0xff] %v578
      %p580 = scmp.eq.s32.totalorder %s19, 1
      // Predicated region
      $region37: #{_lambda_.9} parent=31 // pred_check
        %p581 = pneg %p580
      $region38: #{_lambda_.9} parent=31 // pred_check_branch
        %583 = sbr.rel (%p581) target = $region40
      $region39: #{_lambda_.9} parent=31 // pred_region
        %v584 = vld [vmem:[#allocation2] sm:$0xff]
        %v585 = vld [vmem:[%s2] sm:$0x1]
        %v587 = vlaneseq
        %v588 = vshrl.u32 %v587, 7
        %v589 = vsub.s32 0, %v588
        %v590 = vrot.slane %v585, %v589
        %v592 = vadd.f32 %v584, %v590
        %593 = vst [vmem:[%s218] sm:$0xff] %v592
      $region40: #{_lambda_.9} parent=31 // pred_fallthru
        _
      %p594 = scmp.lt.s32.totalorder %s18, 0
      %s595 = scalar_select %p594, %s18, 0
      %s596 = smul.addr %s595, 8
      %s597 = scalar_lea.vmem %s3, %s596
      // Predicated region
      $region41: #{_lambda_.9} parent=31 // pred_check
        %p598 = pneg %p119
      $region42: #{_lambda_.9} parent=31 // pred_check_branch
        %600 = sbr.rel (%p598) target = $region44
      $region43: #{_lambda_.9} parent=31 // pred_region
        _
      $region44: #{_lambda_.9} parent=31 // pred_fallthru
        _
      // Predicated region
      $region45: #{_lambda_.9} parent=31 // pred_check
        %p601 = pneg %p119
      $region46: #{_lambda_.9} parent=31 // pred_check_branch
        %603 = sbr.rel (%p601) target = $region48
      $region47: #{_lambda_.9} parent=31 // pred_region
        %p604 = scmp.lt.s32.totalorder %s18, 0
        %s605 = scalar_select %p604, %s18, 0
        %s606 = smul.addr %s605, 8
        %s607 = scalar_lea.vmem %s3, %s606
      $region48: #{_lambda_.9} parent=31 // pred_fallthru
        _
    $region32: #{_lambda_.9} parent=5 // pred_fallthru
      _
    %p608 = scmp.le.s32.totalorder 2, %s9
    // Predicated region
    $region49: #{_lambda_.9} parent=5 // pred_check
      %p609 = pneg %p608
    $region50: #{_lambda_.9} parent=5 // pred_check_branch
      %611 = sbr.rel (%p609) target = $region52
    $region51: #{_lambda_.9} parent=5 // pred_region
      %s612 = ssub.s32 %s9, 2
    $region52: #{_lambda_.9} parent=5 // pred_fallthru
      _
  $region6: #{_lambda_.9} parent=0 // loop_footer
    %s13 = sadd.s32 1, %s9
  $region7: #{_lambda_.9} parent=0 // loop_footer_branch
    %8 = sbr.rel target = $region3
  $region8: #{_lambda_.9} parent=0 // loop_exit
    _

</llo_original>
